<compile_context>
chip_gen: v7x
topology: tpu7x:2x2x1
jax: 0.10.0
libtpu: 0.0.40
codegen_flags: <defaults>
</compile_context>

<pallas_src>
import jax
import jax.numpy as jnp
from jax import lax
from jax.experimental import pallas as pl
from jax.experimental.pallas import tpu as pltpu

POOL_SIZES = (5, 9, 13)          # module default; 9 = 5∘5 and 13 = 5∘5∘5 (chained below)
Q = POOL_SIZES[0] // 2           # radius of the base 5x5 pool


def spp_kernel(x_ref, o_ref, buf_ref):
    """x_ref: (H, W, Cb);  o_ref: (4, H, W, Cb);  buf_ref: (H+2Q, W+2Q, Cb) VMEM scratch."""
    H, W, _ = x_ref.shape
    x = x_ref[...]

    # Identity feature map is concatenated last in the torch module.
    o_ref[3] = x

    # -inf halo reproduces MaxPool2d's implicit padding; interior is overwritten below.
    if jnp.issubdtype(buf_ref.dtype, jnp.floating):
        neg = -jnp.inf
    else:  # integer feature maps: dtype min (same clipped-window semantics)
        neg = jnp.iinfo(buf_ref.dtype).min
    buf_ref[...] = jnp.full(buf_ref.shape, neg, dtype=buf_ref.dtype)
    buf_ref[Q:Q + H, Q:Q + W, :] = x

    # Chained 5x5 pools: slab 2 = pool5, slab 1 = pool5^2 = pool9, slab 0 = pool5^3 = pool13.
    for slab in (2, 1, 0):
        v = buf_ref[...]                                  # (H+2Q, W+2Q, Cb)
        # Separable window max: along W (sublane axis) ...
        r = v[:, 0:W, :]
        for d in range(1, 2 * Q + 1):
            r = jnp.maximum(r, v[:, d:d + W, :])
        # ... then along H (major axis).
        p = r[0:H]
        for d in range(1, 2 * Q + 1):
            p = jnp.maximum(p, r[d:d + H])
        o_ref[slab] = p
        if slab != 0:
            buf_ref[Q:Q + H, Q:Q + W, :] = p              # feed next chained pool (halo stays -inf)


def _channel_block(C):
    # Lane-dense channel tile: 128 keeps the lane axis full while bounding per-step
    # VMEM well under the default scoped limits on v5e/v6e/v7x; tiny C uses all of C.
    return 128 if C % 128 == 0 else C


@jax.jit
def spatial_pyramid_pooling(x):
    """x: (N, C, H, W) -> (N, 4*C, H, W)  (channel order: pool13, pool9, pool5, identity)."""
    N, C, H, W = x.shape
    cb = _channel_block(C)

    # Channels-last so C sits on the 128-wide lane axis inside the kernel.
    x_nhwc = jnp.transpose(x, (0, 2, 3, 1))

    out5 = pl.pallas_call(
        spp_kernel,
        out_shape=jax.ShapeDtypeStruct((N, 4, H, W, C), x.dtype),
        grid=(N, C // cb),
        in_specs=[pl.BlockSpec((None, H, W, cb), lambda n, c: (n, 0, 0, c))],
        out_specs=pl.BlockSpec((None, 4, H, W, cb), lambda n, c: (n, 0, 0, 0, c)),
        scratch_shapes=[pltpu.VMEM((H + 2 * Q, W + 2 * Q, cb), x.dtype)],
        compiler_params=pltpu.CompilerParams(
            dimension_semantics=("parallel", "parallel"),
        ),
    )(x_nhwc)

    # (N, 4, H, W, C) -> (N, 4, C, H, W) -> (N, 4C, H, W): matches torch's channel concat.
    return jnp.transpose(out5, (0, 1, 4, 2, 3)).reshape(N, 4 * C, H, W)


def _reference_spp(x):
    """Pure-JAX reference (lax.reduce_window) for correctness checking."""
    def pool(v, ps):
        p = ps // 2
        return lax.reduce_window(
            v, -jnp.inf, lax.max,
            window_dimensions=(1, 1, ps, ps),
            window_strides=(1, 1, 1, 1),
            padding=((0, 0), (0, 0), (p, p), (p, p)),
        )
    fms = [pool(x, ps) for ps in POOL_SIZES[::-1]]
    return jnp.concatenate(fms + [x], axis=1)


if __name__ == "__main__":
    key = jax.random.PRNGKey(0)
    x = jax.random.normal(key, (2, 4, 16, 16), dtype=jnp.float32)

    out = jax.block_until_ready(spatial_pyramid_pooling(x))
    ref = _reference_spp(x)

    assert out.shape == (2, 16, 16, 16), out.shape
    assert out.dtype == x.dtype
    assert jnp.allclose(out, ref), "Pallas SPP does not match reference"

    print("KERNEL_OK")
</pallas_src>

<mosaic_0001>
module attributes {stable_mosaic.version = 11 : i64} {
  func.func @spp_kernel(%arg0: i32, %arg1: i32, %arg2: memref<1x16x16x4xf32, #tpu.memory_space<vmem>>, %arg3: memref<1x4x16x16x4xf32, #tpu.memory_space<vmem>>, %arg4: memref<20x20x4xf32, #tpu.memory_space<vmem>>) attributes {dimension_semantics = [#tpu.dimension_semantics<parallel>, #tpu.dimension_semantics<parallel>], iteration_bounds = array<i64: 2, 1>, scalar_prefetch = 0 : i64, scratch_operands = 1 : i64, tpu.core_type = #tpu.core_type<tc>, window_params = [{transform_indices = @transform_0, window_bounds = array<i64: 1, 16, 16, 4>}, {transform_indices = @transform_1, window_bounds = array<i64: 1, 4, 16, 16, 4>}]} {
    %c0 = arith.constant 0 : index
    %c0_0 = arith.constant 0 : index
    %c0_1 = arith.constant 0 : index
    %c0_2 = arith.constant 0 : index
    %0 = vector.load %arg2[%c0, %c0_0, %c0_1, %c0_2] : memref<1x16x16x4xf32, #tpu.memory_space<vmem>>, vector<1x16x16x4xf32>
    %1 = vector.shape_cast %0 : vector<1x16x16x4xf32> to vector<16x16x4xf32>
    %c0_3 = arith.constant 0 : index
    %c3 = arith.constant 3 : index
    %c0_4 = arith.constant 0 : index
    %c0_5 = arith.constant 0 : index
    %c0_6 = arith.constant 0 : index
    %2 = vector.load %arg3[%c0_3, %c3, %c0_4, %c0_5, %c0_6] : memref<1x4x16x16x4xf32, #tpu.memory_space<vmem>>, vector<1x1x16x16x4xf32>
    %3 = vector.shape_cast %2 : vector<1x1x16x16x4xf32> to vector<16x16x4xf32>
    %4 = vector.shape_cast %1 : vector<16x16x4xf32> to vector<1x1x16x16x4xf32>
    tpu.vector_store %arg3[%c0_3, %c3, %c0_4, %c0_5, %c0_6], %4 {strides = array<i32>} : memref<1x4x16x16x4xf32, #tpu.memory_space<vmem>>, vector<1x1x16x16x4xf32>,
    %cst = arith.constant 0xFF800000 : f32
    %5 = vector.broadcast %cst : f32 to vector<20x20x4xf32>
    %c0_7 = arith.constant 0 : index
    %c0_8 = arith.constant 0 : index
    %c0_9 = arith.constant 0 : index
    %6 = vector.load %arg4[%c0_7, %c0_8, %c0_9] : memref<20x20x4xf32, #tpu.memory_space<vmem>>, vector<20x20x4xf32>
    tpu.vector_store %arg4[%c0_7, %c0_8, %c0_9], %5 {strides = array<i32>} : memref<20x20x4xf32, #tpu.memory_space<vmem>>, vector<20x20x4xf32>,
    %c2 = arith.constant 2 : index
    %c2_10 = arith.constant 2 : index
    %c0_11 = arith.constant 0 : index
    %7 = vector.load %arg4[%c2, %c2_10, %c0_11] : memref<20x20x4xf32, #tpu.memory_space<vmem>>, vector<16x16x4xf32>
    tpu.vector_store %arg4[%c2, %c2_10, %c0_11], %1 {strides = array<i32>} : memref<20x20x4xf32, #tpu.memory_space<vmem>>, vector<16x16x4xf32>,
    %c0_12 = arith.constant 0 : index
    %c0_13 = arith.constant 0 : index
    %c0_14 = arith.constant 0 : index
    %8 = vector.load %arg4[%c0_12, %c0_13, %c0_14] : memref<20x20x4xf32, #tpu.memory_space<vmem>>, vector<20x20x4xf32>
    %9 = vector.extract_strided_slice %8 {offsets = [0, 0, 0], sizes = [20, 16, 4], strides = [1, 1, 1]} : vector<20x20x4xf32> to vector<20x16x4xf32>
    %10 = vector.extract_strided_slice %8 {offsets = [0, 1, 0], sizes = [20, 16, 4], strides = [1, 1, 1]} : vector<20x20x4xf32> to vector<20x16x4xf32>
    %11 = arith.maximumf %9, %10 : vector<20x16x4xf32>
    %12 = vector.extract_strided_slice %8 {offsets = [0, 2, 0], sizes = [20, 16, 4], strides = [1, 1, 1]} : vector<20x20x4xf32> to vector<20x16x4xf32>
    %13 = arith.maximumf %11, %12 : vector<20x16x4xf32>
    %14 = vector.extract_strided_slice %8 {offsets = [0, 3, 0], sizes = [20, 16, 4], strides = [1, 1, 1]} : vector<20x20x4xf32> to vector<20x16x4xf32>
    %15 = arith.maximumf %13, %14 : vector<20x16x4xf32>
    %16 = vector.extract_strided_slice %8 {offsets = [0, 4, 0], sizes = [20, 16, 4], strides = [1, 1, 1]} : vector<20x20x4xf32> to vector<20x16x4xf32>
    %17 = arith.maximumf %15, %16 : vector<20x16x4xf32>
    %18 = vector.extract_strided_slice %17 {offsets = [0, 0, 0], sizes = [16, 16, 4], strides = [1, 1, 1]} : vector<20x16x4xf32> to vector<16x16x4xf32>
    %19 = vector.extract_strided_slice %17 {offsets = [1, 0, 0], sizes = [16, 16, 4], strides = [1, 1, 1]} : vector<20x16x4xf32> to vector<16x16x4xf32>
    %20 = arith.maximumf %18, %19 : vector<16x16x4xf32>
    %21 = vector.extract_strided_slice %17 {offsets = [2, 0, 0], sizes = [16, 16, 4], strides = [1, 1, 1]} : vector<20x16x4xf32> to vector<16x16x4xf32>
    %22 = arith.maximumf %20, %21 : vector<16x16x4xf32>
    %23 = vector.extract_strided_slice %17 {offsets = [3, 0, 0], sizes = [16, 16, 4], strides = [1, 1, 1]} : vector<20x16x4xf32> to vector<16x16x4xf32>
    %24 = arith.maximumf %22, %23 : vector<16x16x4xf32>
    %25 = vector.extract_strided_slice %17 {offsets = [4, 0, 0], sizes = [16, 16, 4], strides = [1, 1, 1]} : vector<20x16x4xf32> to vector<16x16x4xf32>
    %26 = arith.maximumf %24, %25 : vector<16x16x4xf32>
    %c0_15 = arith.constant 0 : index
    %c2_16 = arith.constant 2 : index
    %c0_17 = arith.constant 0 : index
    %c0_18 = arith.constant 0 : index
    %c0_19 = arith.constant 0 : index
    %27 = vector.load %arg3[%c0_15, %c2_16, %c0_17, %c0_18, %c0_19] : memref<1x4x16x16x4xf32, #tpu.memory_space<vmem>>, vector<1x1x16x16x4xf32>
    %28 = vector.shape_cast %27 : vector<1x1x16x16x4xf32> to vector<16x16x4xf32>
    %29 = vector.shape_cast %26 : vector<16x16x4xf32> to vector<1x1x16x16x4xf32>
    tpu.vector_store %arg3[%c0_15, %c2_16, %c0_17, %c0_18, %c0_19], %29 {strides = array<i32>} : memref<1x4x16x16x4xf32, #tpu.memory_space<vmem>>, vector<1x1x16x16x4xf32>,
    %c2_20 = arith.constant 2 : index
    %c2_21 = arith.constant 2 : index
    %c0_22 = arith.constant 0 : index
    %30 = vector.load %arg4[%c2_20, %c2_21, %c0_22] : memref<20x20x4xf32, #tpu.memory_space<vmem>>, vector<16x16x4xf32>
    tpu.vector_store %arg4[%c2_20, %c2_21, %c0_22], %26 {strides = array<i32>} : memref<20x20x4xf32, #tpu.memory_space<vmem>>, vector<16x16x4xf32>,
    %c0_23 = arith.constant 0 : index
    %c0_24 = arith.constant 0 : index
    %c0_25 = arith.constant 0 : index
    %31 = vector.load %arg4[%c0_23, %c0_24, %c0_25] : memref<20x20x4xf32, #tpu.memory_space<vmem>>, vector<20x20x4xf32>
    %32 = vector.extract_strided_slice %31 {offsets = [0, 0, 0], sizes = [20, 16, 4], strides = [1, 1, 1]} : vector<20x20x4xf32> to vector<20x16x4xf32>
    %33 = vector.extract_strided_slice %31 {offsets = [0, 1, 0], sizes = [20, 16, 4], strides = [1, 1, 1]} : vector<20x20x4xf32> to vector<20x16x4xf32>
    %34 = arith.maximumf %32, %33 : vector<20x16x4xf32>
    %35 = vector.extract_strided_slice %31 {offsets = [0, 2, 0], sizes = [20, 16, 4], strides = [1, 1, 1]} : vector<20x20x4xf32> to vector<20x16x4xf32>
    %36 = arith.maximumf %34, %35 : vector<20x16x4xf32>
    %37 = vector.extract_strided_slice %31 {offsets = [0, 3, 0], sizes = [20, 16, 4], strides = [1, 1, 1]} : vector<20x20x4xf32> to vector<20x16x4xf32>
    %38 = arith.maximumf %36, %37 : vector<20x16x4xf32>
    %39 = vector.extract_strided_slice %31 {offsets = [0, 4, 0], sizes = [20, 16, 4], strides = [1, 1, 1]} : vector<20x20x4xf32> to vector<20x16x4xf32>
    %40 = arith.maximumf %38, %39 : vector<20x16x4xf32>
    %41 = vector.extract_strided_slice %40 {offsets = [0, 0, 0], sizes = [16, 16, 4], strides = [1, 1, 1]} : vector<20x16x4xf32> to vector<16x16x4xf32>
    %42 = vector.extract_strided_slice %40 {offsets = [1, 0, 0], sizes = [16, 16, 4], strides = [1, 1, 1]} : vector<20x16x4xf32> to vector<16x16x4xf32>
    %43 = arith.maximumf %41, %42 : vector<16x16x4xf32>
    %44 = vector.extract_strided_slice %40 {offsets = [2, 0, 0], sizes = [16, 16, 4], strides = [1, 1, 1]} : vector<20x16x4xf32> to vector<16x16x4xf32>
    %45 = arith.maximumf %43, %44 : vector<16x16x4xf32>
    %46 = vector.extract_strided_slice %40 {offsets = [3, 0, 0], sizes = [16, 16, 4], strides = [1, 1, 1]} : vector<20x16x4xf32> to vector<16x16x4xf32>
    %47 = arith.maximumf %45, %46 : vector<16x16x4xf32>
    %48 = vector.extract_strided_slice %40 {offsets = [4, 0, 0], sizes = [16, 16, 4], strides = [1, 1, 1]} : vector<20x16x4xf32> to vector<16x16x4xf32>
    %49 = arith.maximumf %47, %48 : vector<16x16x4xf32>
    %c0_26 = arith.constant 0 : index
    %c1 = arith.constant 1 : index
    %c0_27 = arith.constant 0 : index
    %c0_28 = arith.constant 0 : index
    %c0_29 = arith.constant 0 : index
    %50 = vector.load %arg3[%c0_26, %c1, %c0_27, %c0_28, %c0_29] : memref<1x4x16x16x4xf32, #tpu.memory_space<vmem>>, vector<1x1x16x16x4xf32>
    %51 = vector.shape_cast %50 : vector<1x1x16x16x4xf32> to vector<16x16x4xf32>
    %52 = vector.shape_cast %49 : vector<16x16x4xf32> to vector<1x1x16x16x4xf32>
    tpu.vector_store %arg3[%c0_26, %c1, %c0_27, %c0_28, %c0_29], %52 {strides = array<i32>} : memref<1x4x16x16x4xf32, #tpu.memory_space<vmem>>, vector<1x1x16x16x4xf32>,
    %c2_30 = arith.constant 2 : index
    %c2_31 = arith.constant 2 : index
    %c0_32 = arith.constant 0 : index
    %53 = vector.load %arg4[%c2_30, %c2_31, %c0_32] : memref<20x20x4xf32, #tpu.memory_space<vmem>>, vector<16x16x4xf32>
    tpu.vector_store %arg4[%c2_30, %c2_31, %c0_32], %49 {strides = array<i32>} : memref<20x20x4xf32, #tpu.memory_space<vmem>>, vector<16x16x4xf32>,
    %c0_33 = arith.constant 0 : index
    %c0_34 = arith.constant 0 : index
    %c0_35 = arith.constant 0 : index
    %54 = vector.load %arg4[%c0_33, %c0_34, %c0_35] : memref<20x20x4xf32, #tpu.memory_space<vmem>>, vector<20x20x4xf32>
    %55 = vector.extract_strided_slice %54 {offsets = [0, 0, 0], sizes = [20, 16, 4], strides = [1, 1, 1]} : vector<20x20x4xf32> to vector<20x16x4xf32>
    %56 = vector.extract_strided_slice %54 {offsets = [0, 1, 0], sizes = [20, 16, 4], strides = [1, 1, 1]} : vector<20x20x4xf32> to vector<20x16x4xf32>
    %57 = arith.maximumf %55, %56 : vector<20x16x4xf32>
    %58 = vector.extract_strided_slice %54 {offsets = [0, 2, 0], sizes = [20, 16, 4], strides = [1, 1, 1]} : vector<20x20x4xf32> to vector<20x16x4xf32>
    %59 = arith.maximumf %57, %58 : vector<20x16x4xf32>
    %60 = vector.extract_strided_slice %54 {offsets = [0, 3, 0], sizes = [20, 16, 4], strides = [1, 1, 1]} : vector<20x20x4xf32> to vector<20x16x4xf32>
    %61 = arith.maximumf %59, %60 : vector<20x16x4xf32>
    %62 = vector.extract_strided_slice %54 {offsets = [0, 4, 0], sizes = [20, 16, 4], strides = [1, 1, 1]} : vector<20x20x4xf32> to vector<20x16x4xf32>
    %63 = arith.maximumf %61, %62 : vector<20x16x4xf32>
    %64 = vector.extract_strided_slice %63 {offsets = [0, 0, 0], sizes = [16, 16, 4], strides = [1, 1, 1]} : vector<20x16x4xf32> to vector<16x16x4xf32>
    %65 = vector.extract_strided_slice %63 {offsets = [1, 0, 0], sizes = [16, 16, 4], strides = [1, 1, 1]} : vector<20x16x4xf32> to vector<16x16x4xf32>
    %66 = arith.maximumf %64, %65 : vector<16x16x4xf32>
    %67 = vector.extract_strided_slice %63 {offsets = [2, 0, 0], sizes = [16, 16, 4], strides = [1, 1, 1]} : vector<20x16x4xf32> to vector<16x16x4xf32>
    %68 = arith.maximumf %66, %67 : vector<16x16x4xf32>
    %69 = vector.extract_strided_slice %63 {offsets = [3, 0, 0], sizes = [16, 16, 4], strides = [1, 1, 1]} : vector<20x16x4xf32> to vector<16x16x4xf32>
    %70 = arith.maximumf %68, %69 : vector<16x16x4xf32>
    %71 = vector.extract_strided_slice %63 {offsets = [4, 0, 0], sizes = [16, 16, 4], strides = [1, 1, 1]} : vector<20x16x4xf32> to vector<16x16x4xf32>
    %72 = arith.maximumf %70, %71 : vector<16x16x4xf32>
    %c0_36 = arith.constant 0 : index
    %c0_37 = arith.constant 0 : index
    %c0_38 = arith.constant 0 : index
    %c0_39 = arith.constant 0 : index
    %c0_40 = arith.constant 0 : index
    %73 = vector.load %arg3[%c0_36, %c0_37, %c0_38, %c0_39, %c0_40] : memref<1x4x16x16x4xf32, #tpu.memory_space<vmem>>, vector<1x1x16x16x4xf32>
    %74 = vector.shape_cast %73 : vector<1x1x16x16x4xf32> to vector<16x16x4xf32>
    %75 = vector.shape_cast %72 : vector<16x16x4xf32> to vector<1x1x16x16x4xf32>
    tpu.vector_store %arg3[%c0_36, %c0_37, %c0_38, %c0_39, %c0_40], %75 {strides = array<i32>} : memref<1x4x16x16x4xf32, #tpu.memory_space<vmem>>, vector<1x1x16x16x4xf32>,
    return
  }
  func.func @transform_0(%arg0: i32, %arg1: i32) -> (i32, i32, i32, i32) {
    %c0_i32 = arith.constant 0 : i32
    %c0_i32_0 = arith.constant 0 : i32
    %c0_i32_1 = arith.constant 0 : i32
    return %arg0, %c0_i32, %c0_i32_0, %arg1 : i32, i32, i32, i32
  }
  func.func @transform_1(%arg0: i32, %arg1: i32) -> (i32, i32, i32, i32, i32) {
    %c0_i32 = arith.constant 0 : i32
    %c0_i32_0 = arith.constant 0 : i32
    %c0_i32_1 = arith.constant 0 : i32
    %c0_i32_2 = arith.constant 0 : i32
    return %arg0, %c0_i32, %c0_i32_0, %c0_i32_1, %arg1 : i32, i32, i32, i32, i32
  }
}

</mosaic_0001>

<llo_original>
// kernel: spatial_pyramid_pooling.1
$region0: #{spatial_pyramid_pooling.1}
  #allocation0 [shape = 'u32[]', space=smem, size = 0x4, offset = 0x4, fixed_abs, tag = 'smem constant byte address 0x4 - core index']
  #allocation1 [shape = 'u32[144,128]{1,0:T(1,128)}', space=vmem, size = 0x12000, scoped, tag = 'internal scratch']
  #allocation2 [shape = 'f32[20,20,4]{2,1,0:T(8,128)}', space=vmem, size = 0x3c000, scoped, tag = 'scratch operand']
  %s0 = inlined_call_operand.vmem [shape: f32[2,16,16,4], index: 0, kind: input, shape index: {}]
  %s1 = inlined_call_operand.vmem [shape: f32[2,4,16,16,4], index: 1, kind: output, shape index: {}]
  %s2 = sld [smem:[#allocation0]]
  $region37: #{spatial_pyramid_pooling.1} parent=0
    _
  %s4 = ssub.s32 1, %s2
  %s5 = scalar_select 0, %s4, %s2
  loop: start=0, step=1, limit=4
  $region2: #{spatial_pyramid_pooling.1} parent=0 // loop_pre_header
    _
  $region3: #{spatial_pyramid_pooling.1} parent=0 // loop_header
    %s7 = sphi 0, %s11
    %p8 = scmp.ge.s32.totalorder %s7, 4
    %s14 = sphi 0, %s26
    %s15 = sphi 0, %s22
    %s16 = sphi 0, %s14
    %s17 = sphi 0, %s15
    %s18 = sphi 0, %s16
    %s19 = sphi 0, %s17
    %s31 = sphi 0, %s33
    %s34 = sphi 0, %s31
    %s35 = sphi 0, %s34
    %s51 = sphi 0, %s35
    %s59 = sphi 0, %s61
    %s62 = sphi 0, %s59
    %s63 = sphi 0, %s62
    %s79 = sphi 0, %s63
  $region4: #{spatial_pyramid_pooling.1} parent=0 // loop_header_branch
    %10 = sbr.rel (%p8) target = $region8
  $region5: #{spatial_pyramid_pooling.1} parent=0 // loop_body
    %s12 = ssub.s32 %s7, 1
    %s13 = ssub.s32 %s7, 2
    %s20 = sadd.s32 1, %s15
    %p21 = scmp.ge.s32.totalorder %s20, 1
    %s22 = scalar_select %p21, 0, %s20
    %s23 = sadd.s32 1, %s14
    %s24 = scalar_select %p21, %s23, %s14
    %p25 = scmp.ge.s32.totalorder %s24, 2
    %s26 = scalar_select %p25, 0, %s24
    %s27 = ssub.s32 %s14, %s26
    %s28 = ssub.s32 %s15, %s22
    %s29 = sor.u32 %s27, %s28
    %p30 = scmp.eq.s32.totalorder %s29, 0
    %s32 = sadd.s32 %s31, 1
    %s33 = scalar_select %p30, %s31, %s32
    %p36 = pneg %p30
    %p37 = scmp.eq.s32.totalorder %s7, 1
    %p38 = por %p36, %p37
    %p39 = scmp.ne.s32.totalorder %s31, %s34
    %p40 = scmp.eq.s32.totalorder %s7, 0
    %p41 = por %p39, %p40
    %p42 = scmp.ne.s32.totalorder %s31, %s34
    %p43 = scmp.eq.s32.totalorder %s12, 1
    %p44 = por %p42, %p43
    %p45 = scmp.ne.s32.totalorder %s34, %s35
    %p46 = scmp.eq.s32.totalorder %s12, 0
    %p47 = por %p45, %p46
    %p48 = scmp.ne.s32.totalorder %s34, %s35
    %p49 = scmp.eq.s32.totalorder %s13, 1
    %p50 = por %p48, %p49
    %p52 = scmp.ne.s32.totalorder %s35, %s51
    %p53 = scmp.eq.s32.totalorder %s13, 0
    %p54 = por %p52, %p53
    %s55 = ssub.s32 %s14, %s26
    %s56 = ssub.s32 %s15, %s22
    %s57 = sor.u32 %s55, %s56
    %p58 = scmp.eq.s32.totalorder %s57, 0
    %s60 = sadd.s32 %s59, 1
    %s61 = scalar_select %p58, %s59, %s60
    %p64 = pneg %p58
    %p65 = scmp.eq.s32.totalorder %s7, 1
    %p66 = por %p64, %p65
    %p67 = scmp.ne.s32.totalorder %s59, %s62
    %p68 = scmp.eq.s32.totalorder %s7, 0
    %p69 = por %p67, %p68
    %p70 = scmp.ne.s32.totalorder %s59, %s62
    %p71 = scmp.eq.s32.totalorder %s12, 1
    %p72 = por %p70, %p71
    %p73 = scmp.ne.s32.totalorder %s62, %s63
    %p74 = scmp.eq.s32.totalorder %s12, 0
    %p75 = por %p73, %p74
    %p76 = scmp.ne.s32.totalorder %s62, %s63
    %p77 = scmp.eq.s32.totalorder %s13, 1
    %p78 = por %p76, %p77
    %p80 = scmp.ne.s32.totalorder %s63, %s79
    %p81 = scmp.eq.s32.totalorder %s13, 0
    %p82 = por %p80, %p81
    %p83 = scmp.le.s32.totalorder 1, %s7
    %p84 = scmp.lt.s32.totalorder %s7, 3
    %p85 = pnand %p83, %p84
    %p86 = pneg %p85
    // Predicated region
    $region9: #{spatial_pyramid_pooling.1} parent=5 // pred_check
      _
    $region10: #{spatial_pyramid_pooling.1} parent=5 // pred_check_branch
      %88 = sbr.rel (%p85) target = $region12
    $region11: #{spatial_pyramid_pooling.1} parent=5 // pred_region
      %s89 = ssub.s32 %s7, 1
    $region12: #{spatial_pyramid_pooling.1} parent=5 // pred_fallthru
      _
    %p90 = scmp.lt.s32.totalorder %s7, 2
    // Predicated region
    $region13: #{spatial_pyramid_pooling.1} parent=5 // pred_check
      %p91 = pneg %p90
    $region14: #{spatial_pyramid_pooling.1} parent=5 // pred_check_branch
      %93 = sbr.rel (%p91) target = $region16
    $region15: #{spatial_pyramid_pooling.1} parent=5 // pred_region
      // Predicated region
      $region17: #{spatial_pyramid_pooling.1} parent=15 // pred_check
        %p94 = pneg %p41
      $region18: #{spatial_pyramid_pooling.1} parent=15 // pred_check_branch
        %96 = sbr.rel (%p94) target = $region20
      $region19: #{spatial_pyramid_pooling.1} parent=15 // pred_region
        %p97 = scmp.lt.s32.totalorder %s14, 1
        %s98 = scalar_select %p97, %s14, 1
        %p99 = scmp.lt.s32.totalorder %s15, 0
        %s100 = scalar_select %p99, %s15, 0
        %s101 = smul.addr %s98, 32
        %s102 = sadd.s32 %s100, %s101
        %s103 = smul.addr %s102, 8
        %s104 = scalar_lea.vmem %s0, %s103
      $region20: #{spatial_pyramid_pooling.1} parent=15 // pred_fallthru
        _
    $region16: #{spatial_pyramid_pooling.1} parent=5 // pred_fallthru
      _
    %p105 = scmp.le.s32.totalorder 1, %s7
    %p106 = scmp.lt.s32.totalorder %s7, 3
    %p107 = pnand %p105, %p106
    %p108 = pneg %p107
    // Predicated region
    $region21: #{spatial_pyramid_pooling.1} parent=5 // pred_check
      _
    $region22: #{spatial_pyramid_pooling.1} parent=5 // pred_check_branch
      %110 = sbr.rel (%p107) target = $region24
    $region23: #{spatial_pyramid_pooling.1} parent=5 // pred_region
      %s111 = ssub.s32 %s7, 1
      %p112 = scmp.lt.s32.totalorder %s16, 1
      %s113 = scalar_select %p112, %s16, 1
      %p114 = scmp.lt.s32.totalorder %s17, 0
      %s115 = scalar_select %p114, %s17, 0
      %s116 = smul.addr %s113, 32
      %s117 = sadd.s32 %s115, %s116
      %s118 = smul.addr %s117, 8
      %s119 = scalar_lea.vmem %s0, %s118
      %p120 = pneg %p47
      %p121 = pneg %p44
      %p122 = pneg %p75
      %p123 = pneg %p72
      %p124 = scmp.lt.s32.totalorder %s16, 1
      %s125 = scalar_select %p124, %s16, 1
      %p126 = scmp.lt.s32.totalorder %s17, 0
      %s127 = scalar_select %p126, %s17, 0
      %s128 = smul.addr %s125, 128
      %s129 = sadd.s32 %s127, %s128
      %s130 = smul.addr %s129, 8
      %s131 = scalar_lea.vmem %s1, %s130
      %p132 = scmp.lt.s32.totalorder %s16, 1
      %s133 = scalar_select %p132, %s16, 1
      %p134 = scmp.lt.s32.totalorder %s17, 0
      %s135 = scalar_select %p134, %s17, 0
      %s136 = smul.addr %s133, 32
      %s137 = sadd.s32 %s135, %s136
      %s138 = smul.addr %s137, 8
      %s139 = scalar_lea.vmem %s0, %s138
      %p140 = scmp.lt.s32.totalorder %s16, 1
      %s141 = scalar_select %p140, %s16, 1
      %p142 = scmp.lt.s32.totalorder %s17, 0
      %s143 = scalar_select %p142, %s17, 0
      %s144 = smul.addr %s141, 128
      %s145 = sadd.s32 %s143, %s144
      %s146 = smul.addr %s145, 8
      %s147 = scalar_lea.vmem %s1, %s146
      %v148 = vld [vmem:[%s139] sm:$0xff]
      %v149 = vld [vmem:[%s139 + $0x8] sm:$0xff]
      %v150 = vld [vmem:[%s139 + $0x10] sm:$0xff]
      %v151 = vld [vmem:[%s139 + $0x18] sm:$0xff]
      %v152 = vld [vmem:[%s139 + $0x20] sm:$0xff]
      %v153 = vld [vmem:[%s139 + $0x28] sm:$0xff]
      %v154 = vld [vmem:[%s139 + $0x30] sm:$0xff]
      %v155 = vld [vmem:[%s139 + $0x38] sm:$0xff]
      %v156 = vld [vmem:[%s139 + $0x40] sm:$0xff]
      %v157 = vld [vmem:[%s139 + $0x48] sm:$0xff]
      %v158 = vld [vmem:[%s139 + $0x50] sm:$0xff]
      %v159 = vld [vmem:[%s139 + $0x58] sm:$0xff]
      %v160 = vld [vmem:[%s139 + $0x60] sm:$0xff]
      %v161 = vld [vmem:[%s139 + $0x68] sm:$0xff]
      %v162 = vld [vmem:[%s139 + $0x70] sm:$0xff]
      %v163 = vld [vmem:[%s139 + $0x78] sm:$0xff]
      %v164 = vld [vmem:[%s139 + $0x80] sm:$0xff]
      %v165 = vld [vmem:[%s139 + $0x88] sm:$0xff]
      %v166 = vld [vmem:[%s139 + $0x90] sm:$0xff]
      %v167 = vld [vmem:[%s139 + $0x98] sm:$0xff]
      %v168 = vld [vmem:[%s139 + $0xa0] sm:$0xff]
      %v169 = vld [vmem:[%s139 + $0xa8] sm:$0xff]
      %v170 = vld [vmem:[%s139 + $0xb0] sm:$0xff]
      %v171 = vld [vmem:[%s139 + $0xb8] sm:$0xff]
      %v172 = vld [vmem:[%s139 + $0xc0] sm:$0xff]
      %v173 = vld [vmem:[%s139 + $0xc8] sm:$0xff]
      %v174 = vld [vmem:[%s139 + $0xd0] sm:$0xff]
      %v175 = vld [vmem:[%s139 + $0xd8] sm:$0xff]
      %v176 = vld [vmem:[%s139 + $0xe0] sm:$0xff]
      %v177 = vld [vmem:[%s139 + $0xe8] sm:$0xff]
      %v178 = vld [vmem:[%s139 + $0xf0] sm:$0xff]
      %v179 = vld [vmem:[%s139 + $0xf8] sm:$0xff]
      %s180 = scalar_lea.vmem %s147, 768
      %vm181 = vcmask 31744
      %182 = vst.msk [vmem:[%s180] sm:$0xff] %vm181, %v148
      %183 = vst.msk [vmem:[%s180 + $0x8] sm:$0xff] %vm181, %v149
      %184 = vst.msk [vmem:[%s180 + $0x10] sm:$0xff] %vm181, %v150
      %185 = vst.msk [vmem:[%s180 + $0x18] sm:$0xff] %vm181, %v151
      %186 = vst.msk [vmem:[%s180 + $0x20] sm:$0xff] %vm181, %v152
      %187 = vst.msk [vmem:[%s180 + $0x28] sm:$0xff] %vm181, %v153
      %188 = vst.msk [vmem:[%s180 + $0x30] sm:$0xff] %vm181, %v154
      %189 = vst.msk [vmem:[%s180 + $0x38] sm:$0xff] %vm181, %v155
      %190 = vst.msk [vmem:[%s180 + $0x40] sm:$0xff] %vm181, %v156
      %191 = vst.msk [vmem:[%s180 + $0x48] sm:$0xff] %vm181, %v157
      %192 = vst.msk [vmem:[%s180 + $0x50] sm:$0xff] %vm181, %v158
      %193 = vst.msk [vmem:[%s180 + $0x58] sm:$0xff] %vm181, %v159
      %194 = vst.msk [vmem:[%s180 + $0x60] sm:$0xff] %vm181, %v160
      %195 = vst.msk [vmem:[%s180 + $0x68] sm:$0xff] %vm181, %v161
      %196 = vst.msk [vmem:[%s180 + $0x70] sm:$0xff] %vm181, %v162
      %197 = vst.msk [vmem:[%s180 + $0x78] sm:$0xff] %vm181, %v163
      %198 = vst.msk [vmem:[%s180 + $0x80] sm:$0xff] %vm181, %v164
      %199 = vst.msk [vmem:[%s180 + $0x88] sm:$0xff] %vm181, %v165
      %200 = vst.msk [vmem:[%s180 + $0x90] sm:$0xff] %vm181, %v166
      %201 = vst.msk [vmem:[%s180 + $0x98] sm:$0xff] %vm181, %v167
      %202 = vst.msk [vmem:[%s180 + $0xa0] sm:$0xff] %vm181, %v168
      %203 = vst.msk [vmem:[%s180 + $0xa8] sm:$0xff] %vm181, %v169
      %204 = vst.msk [vmem:[%s180 + $0xb0] sm:$0xff] %vm181, %v170
      %205 = vst.msk [vmem:[%s180 + $0xb8] sm:$0xff] %vm181, %v171
      %206 = vst.msk [vmem:[%s180 + $0xc0] sm:$0xff] %vm181, %v172
      %207 = vst.msk [vmem:[%s180 + $0xc8] sm:$0xff] %vm181, %v173
      %208 = vst.msk [vmem:[%s180 + $0xd0] sm:$0xff] %vm181, %v174
      %209 = vst.msk [vmem:[%s180 + $0xd8] sm:$0xff] %vm181, %v175
      %210 = vst.msk [vmem:[%s180 + $0xe0] sm:$0xff] %vm181, %v176
      %211 = vst.msk [vmem:[%s180 + $0xe8] sm:$0xff] %vm181, %v177
      %212 = vst.msk [vmem:[%s180 + $0xf0] sm:$0xff] %vm181, %v178
      %213 = vst.msk [vmem:[%s180 + $0xf8] sm:$0xff] %vm181, %v179
      %214 = vst.msk [vmem:[#allocation2] sm:$0xff] %vm181, -inf
      %215 = vst.msk [vmem:[#allocation2 + $0x8] sm:$0xff] %vm181, -inf
      %vm216 = vcmask 27648
      %217 = vst.msk [vmem:[#allocation2 + $0x10] sm:$0xf] %vm216, -inf
      %218 = vst.msk [vmem:[#allocation2 + $0x18] sm:$0xff] %vm181, -inf
      %219 = vst.msk [vmem:[#allocation2 + $0x20] sm:$0xff] %vm181, -inf
      %220 = vst.msk [vmem:[#allocation2 + $0x28] sm:$0xf] %vm216, -inf
      %221 = vst.msk [vmem:[#allocation2 + $0x30] sm:$0xff] %vm181, -inf
      %222 = vst.msk [vmem:[#allocation2 + $0x38] sm:$0xff] %vm181, -inf
      %223 = vst.msk [vmem:[#allocation2 + $0x40] sm:$0xf] %vm216, -inf
      %224 = vst.msk [vmem:[#allocation2 + $0x48] sm:$0xff] %vm181, -inf
      %225 = vst.msk [vmem:[#allocation2 + $0x50] sm:$0xff] %vm181, -inf
      %226 = vst.msk [vmem:[#allocation2 + $0x58] sm:$0xf] %vm216, -inf
      %227 = vst.msk [vmem:[#allocation2 + $0x60] sm:$0xff] %vm181, -inf
      %228 = vst.msk [vmem:[#allocation2 + $0x68] sm:$0xff] %vm181, -inf
      %229 = vst.msk [vmem:[#allocation2 + $0x70] sm:$0xf] %vm216, -inf
      %230 = vst.msk [vmem:[#allocation2 + $0x78] sm:$0xff] %vm181, -inf
      %231 = vst.msk [vmem:[#allocation2 + $0x80] sm:$0xff] %vm181, -inf
      %232 = vst.msk [vmem:[#allocation2 + $0x88] sm:$0xf] %vm216, -inf
      %233 = vst.msk [vmem:[#allocation2 + $0x90] sm:$0xff] %vm181, -inf
      %234 = vst.msk [vmem:[#allocation2 + $0x98] sm:$0xff] %vm181, -inf
      %235 = vst.msk [vmem:[#allocation2 + $0xa0] sm:$0xf] %vm216, -inf
      %236 = vst.msk [vmem:[#allocation2 + $0xa8] sm:$0xff] %vm181, -inf
      %237 = vst.msk [vmem:[#allocation2 + $0xb0] sm:$0xff] %vm181, -inf
      %238 = vst.msk [vmem:[#allocation2 + $0xb8] sm:$0xf] %vm216, -inf
      %239 = vst.msk [vmem:[#allocation2 + $0xc0] sm:$0xff] %vm181, -inf
      %240 = vst.msk [vmem:[#allocation2 + $0xc8] sm:$0xff] %vm181, -inf
      %241 = vst.msk [vmem:[#allocation2 + $0xd0] sm:$0xf] %vm216, -inf
      %242 = vst.msk [vmem:[#allocation2 + $0xd8] sm:$0xff] %vm181, -inf
      %243 = vst.msk [vmem:[#allocation2 + $0xe0] sm:$0xff] %vm181, -inf
      %244 = vst.msk [vmem:[#allocation2 + $0xe8] sm:$0xf] %vm216, -inf
      %245 = vst.msk [vmem:[#allocation2 + $0xf0] sm:$0xff] %vm181, -inf
      %246 = vst.msk [vmem:[#allocation2 + $0xf8] sm:$0xff] %vm181, -inf
      %247 = vst.msk [vmem:[#allocation2 + $0x100] sm:$0xf] %vm216, -inf
      %248 = vst.msk [vmem:[#allocation2 + $0x108] sm:$0xff] %vm181, -inf
      %249 = vst.msk [vmem:[#allocation2 + $0x110] sm:$0xff] %vm181, -inf
      %250 = vst.msk [vmem:[#allocation2 + $0x118] sm:$0xf] %vm216, -inf
      %251 = vst.msk [vmem:[#allocation2 + $0x120] sm:$0xff] %vm181, -inf
      %252 = vst.msk [vmem:[#allocation2 + $0x128] sm:$0xff] %vm181, -inf
      %253 = vst.msk [vmem:[#allocation2 + $0x130] sm:$0xf] %vm216, -inf
      %254 = vst.msk [vmem:[#allocation2 + $0x138] sm:$0xff] %vm181, -inf
      %255 = vst.msk [vmem:[#allocation2 + $0x140] sm:$0xff] %vm181, -inf
      %256 = vst.msk [vmem:[#allocation2 + $0x148] sm:$0xf] %vm216, -inf
      %257 = vst.msk [vmem:[#allocation2 + $0x150] sm:$0xff] %vm181, -inf
      %258 = vst.msk [vmem:[#allocation2 + $0x158] sm:$0xff] %vm181, -inf
      %259 = vst.msk [vmem:[#allocation2 + $0x160] sm:$0xf] %vm216, -inf
      %260 = vst.msk [vmem:[#allocation2 + $0x168] sm:$0xff] %vm181, -inf
      %261 = vst.msk [vmem:[#allocation2 + $0x170] sm:$0xff] %vm181, -inf
      %262 = vst.msk [vmem:[#allocation2 + $0x178] sm:$0xf] %vm216, -inf
      %263 = vst.msk [vmem:[#allocation2 + $0x180] sm:$0xff] %vm181, -inf
      %264 = vst.msk [vmem:[#allocation2 + $0x188] sm:$0xff] %vm181, -inf
      %265 = vst.msk [vmem:[#allocation2 + $0x190] sm:$0xf] %vm216, -inf
      %266 = vst.msk [vmem:[#allocation2 + $0x198] sm:$0xff] %vm181, -inf
      %267 = vst.msk [vmem:[#allocation2 + $0x1a0] sm:$0xff] %vm181, -inf
      %268 = vst.msk [vmem:[#allocation2 + $0x1a8] sm:$0xf] %vm216, -inf
      %269 = vst.msk [vmem:[#allocation2 + $0x1b0] sm:$0xff] %vm181, -inf
      %270 = vst.msk [vmem:[#allocation2 + $0x1b8] sm:$0xff] %vm181, -inf
      %271 = vst.msk [vmem:[#allocation2 + $0x1c0] sm:$0xf] %vm216, -inf
      %272 = vst.msk [vmem:[#allocation2 + $0x1c8] sm:$0xff] %vm181, -inf
      %273 = vst.msk [vmem:[#allocation2 + $0x1d0] sm:$0xff] %vm181, -inf
      %274 = vst.msk [vmem:[#allocation2 + $0x1d8] sm:$0xf] %vm216, -inf
      %s275 = scalar_lea.vmem [#allocation2], 48
      %276 = vst.msk [vmem:[%s275 + $0x2] sm:$0xff] %vm181, %v148
      %277 = vst.msk [vmem:[%s275 + $0xa] sm:$0xff] %vm181, %v149
      %278 = vst.msk [vmem:[%s275 + $0x1a] sm:$0xff] %vm181, %v150
      %279 = vst.msk [vmem:[%s275 + $0x22] sm:$0xff] %vm181, %v151
      %280 = vst.msk [vmem:[%s275 + $0x32] sm:$0xff] %vm181, %v152
      %281 = vst.msk [vmem:[%s275 + $0x3a] sm:$0xff] %vm181, %v153
      %282 = vst.msk [vmem:[%s275 + $0x4a] sm:$0xff] %vm181, %v154
      %283 = vst.msk [vmem:[%s275 + $0x52] sm:$0xff] %vm181, %v155
      %284 = vst.msk [vmem:[%s275 + $0x62] sm:$0xff] %vm181, %v156
      %285 = vst.msk [vmem:[%s275 + $0x6a] sm:$0xff] %vm181, %v157
      %286 = vst.msk [vmem:[%s275 + $0x7a] sm:$0xff] %vm181, %v158
      %287 = vst.msk [vmem:[%s275 + $0x82] sm:$0xff] %vm181, %v159
      %288 = vst.msk [vmem:[%s275 + $0x92] sm:$0xff] %vm181, %v160
      %289 = vst.msk [vmem:[%s275 + $0x9a] sm:$0xff] %vm181, %v161
      %290 = vst.msk [vmem:[%s275 + $0xaa] sm:$0xff] %vm181, %v162
      %291 = vst.msk [vmem:[%s275 + $0xb2] sm:$0xff] %vm181, %v163
      %292 = vst.msk [vmem:[%s275 + $0xc2] sm:$0xff] %vm181, %v164
      %293 = vst.msk [vmem:[%s275 + $0xca] sm:$0xff] %vm181, %v165
      %294 = vst.msk [vmem:[%s275 + $0xda] sm:$0xff] %vm181, %v166
      %295 = vst.msk [vmem:[%s275 + $0xe2] sm:$0xff] %vm181, %v167
      %296 = vst.msk [vmem:[%s275 + $0xf2] sm:$0xff] %vm181, %v168
      %297 = vst.msk [vmem:[%s275 + $0xfa] sm:$0xff] %vm181, %v169
      %298 = vst.msk [vmem:[%s275 + $0x10a] sm:$0xff] %vm181, %v170
      %299 = vst.msk [vmem:[%s275 + $0x112] sm:$0xff] %vm181, %v171
      %300 = vst.msk [vmem:[%s275 + $0x122] sm:$0xff] %vm181, %v172
      %301 = vst.msk [vmem:[%s275 + $0x12a] sm:$0xff] %vm181, %v173
      %302 = vst.msk [vmem:[%s275 + $0x13a] sm:$0xff] %vm181, %v174
      %303 = vst.msk [vmem:[%s275 + $0x142] sm:$0xff] %vm181, %v175
      %304 = vst.msk [vmem:[%s275 + $0x152] sm:$0xff] %vm181, %v176
      %305 = vst.msk [vmem:[%s275 + $0x15a] sm:$0xff] %vm181, %v177
      %306 = vst.msk [vmem:[%s275 + $0x16a] sm:$0xff] %vm181, %v178
      %307 = vst.msk [vmem:[%s275 + $0x172] sm:$0xff] %vm181, %v179
      %v308 = vld [vmem:[#allocation2] sm:$0xff]
      %v309 = vld [vmem:[#allocation2 + $0x8] sm:$0xff]
      %v310 = vld [vmem:[#allocation2 + $0x10] sm:$0xf]
      %v311 = vld [vmem:[#allocation2 + $0x18] sm:$0xff]
      %v312 = vld [vmem:[#allocation2 + $0x20] sm:$0xff]
      %v313 = vld [vmem:[#allocation2 + $0x28] sm:$0xf]
      %v314 = vld [vmem:[#allocation2 + $0x30] sm:$0xff]
      %v315 = vld [vmem:[#allocation2 + $0x38] sm:$0xff]
      %v316 = vld [vmem:[#allocation2 + $0x40] sm:$0xf]
      %v317 = vld [vmem:[#allocation2 + $0x48] sm:$0xff]
      %v318 = vld [vmem:[#allocation2 + $0x50] sm:$0xff]
      %v319 = vld [vmem:[#allocation2 + $0x58] sm:$0xf]
      %v320 = vld [vmem:[#allocation2 + $0x60] sm:$0xff]
      %v321 = vld [vmem:[#allocation2 + $0x68] sm:$0xff]
      %v322 = vld [vmem:[#allocation2 + $0x70] sm:$0xf]
      %v323 = vld [vmem:[#allocation2 + $0x78] sm:$0xff]
      %v324 = vld [vmem:[#allocation2 + $0x80] sm:$0xff]
      %v325 = vld [vmem:[#allocation2 + $0x88] sm:$0xf]
      %v326 = vld [vmem:[#allocation2 + $0x90] sm:$0xff]
      %v327 = vld [vmem:[#allocation2 + $0x98] sm:$0xff]
      %v328 = vld [vmem:[#allocation2 + $0xa0] sm:$0xf]
      %v329 = vld [vmem:[#allocation2 + $0xa8] sm:$0xff]
      %v330 = vld [vmem:[#allocation2 + $0xb0] sm:$0xff]
      %v331 = vld [vmem:[#allocation2 + $0xb8] sm:$0xf]
      %v332 = vld [vmem:[#allocation2 + $0xc0] sm:$0xff]
      %v333 = vld [vmem:[#allocation2 + $0xc8] sm:$0xff]
      %v334 = vld [vmem:[#allocation2 + $0xd0] sm:$0xf]
      %v335 = vld [vmem:[#allocation2 + $0xd8] sm:$0xff]
      %v336 = vld [vmem:[#allocation2 + $0xe0] sm:$0xff]
      %v337 = vld [vmem:[#allocation2 + $0xe8] sm:$0xf]
      %v338 = vld [vmem:[#allocation2 + $0xf0] sm:$0xff]
      %v339 = vld [vmem:[#allocation2 + $0xf8] sm:$0xff]
      %v340 = vld [vmem:[#allocation2 + $0x100] sm:$0xf]
      %v341 = vld [vmem:[#allocation2 + $0x108] sm:$0xff]
      %v342 = vld [vmem:[#allocation2 + $0x110] sm:$0xff]
      %v343 = vld [vmem:[#allocation2 + $0x118] sm:$0xf]
      %v344 = vld [vmem:[#allocation2 + $0x120] sm:$0xff]
      %v345 = vld [vmem:[#allocation2 + $0x128] sm:$0xff]
      %v346 = vld [vmem:[#allocation2 + $0x130] sm:$0xf]
      %v347 = vld [vmem:[#allocation2 + $0x138] sm:$0xff]
      %v348 = vld [vmem:[#allocation2 + $0x140] sm:$0xff]
      %v349 = vld [vmem:[#allocation2 + $0x148] sm:$0xf]
      %v350 = vld [vmem:[#allocation2 + $0x150] sm:$0xff]
      %v351 = vld [vmem:[#allocation2 + $0x158] sm:$0xff]
      %v352 = vld [vmem:[#allocation2 + $0x160] sm:$0xf]
      %v353 = vld [vmem:[#allocation2 + $0x168] sm:$0xff]
      %v354 = vld [vmem:[#allocation2 + $0x170] sm:$0xff]
      %v355 = vld [vmem:[#allocation2 + $0x178] sm:$0xf]
      %v356 = vld [vmem:[#allocation2 + $0x180] sm:$0xff]
      %v357 = vld [vmem:[#allocation2 + $0x188] sm:$0xff]
      %v358 = vld [vmem:[#allocation2 + $0x190] sm:$0xf]
      %v359 = vld [vmem:[#allocation2 + $0x198] sm:$0xff]
      %v360 = vld [vmem:[#allocation2 + $0x1a0] sm:$0xff]
      %v361 = vld [vmem:[#allocation2 + $0x1a8] sm:$0xf]
      %v362 = vld [vmem:[#allocation2 + $0x1b0] sm:$0xff]
      %v363 = vld [vmem:[#allocation2 + $0x1b8] sm:$0xff]
      %v364 = vld [vmem:[#allocation2 + $0x1c0] sm:$0xf]
      %v365 = vld [vmem:[#allocation2 + $0x1c8] sm:$0xff]
      %v366 = vld [vmem:[#allocation2 + $0x1d0] sm:$0xff]
      %v367 = vld [vmem:[#allocation2 + $0x1d8] sm:$0xf]
      %vm428 = vcmask 1046528
      %v429 = vrot.slane %v308, 1
      %v430 = vrot.slane %v309, 1
      %v431 = vsel %vm428, %v429, %v430
      %v432 = vrot.slane %v310, 1
      %v433 = vsel %vm428, %v430, %v432
      %v434 = vrot.slane %v311, 1
      %v435 = vrot.slane %v312, 1
      %v436 = vsel %vm428, %v434, %v435
      %v437 = vrot.slane %v313, 1
      %v438 = vsel %vm428, %v435, %v437
      %v439 = vrot.slane %v314, 1
      %v440 = vrot.slane %v315, 1
      %v441 = vsel %vm428, %v439, %v440
      %v442 = vrot.slane %v316, 1
      %v443 = vsel %vm428, %v440, %v442
      %v444 = vrot.slane %v317, 1
      %v445 = vrot.slane %v318, 1
      %v446 = vsel %vm428, %v444, %v445
      %v447 = vrot.slane %v319, 1
      %v448 = vsel %vm428, %v445, %v447
      %v449 = vrot.slane %v320, 1
      %v450 = vrot.slane %v321, 1
      %v451 = vsel %vm428, %v449, %v450
      %v452 = vrot.slane %v322, 1
      %v453 = vsel %vm428, %v450, %v452
      %v454 = vrot.slane %v323, 1
      %v455 = vrot.slane %v324, 1
      %v456 = vsel %vm428, %v454, %v455
      %v457 = vrot.slane %v325, 1
      %v458 = vsel %vm428, %v455, %v457
      %v459 = vrot.slane %v326, 1
      %v460 = vrot.slane %v327, 1
      %v461 = vsel %vm428, %v459, %v460
      %v462 = vrot.slane %v328, 1
      %v463 = vsel %vm428, %v460, %v462
      %v464 = vrot.slane %v329, 1
      %v465 = vrot.slane %v330, 1
      %v466 = vsel %vm428, %v464, %v465
      %v467 = vrot.slane %v331, 1
      %v468 = vsel %vm428, %v465, %v467
      %v469 = vrot.slane %v332, 1
      %v470 = vrot.slane %v333, 1
      %v471 = vsel %vm428, %v469, %v470
      %v472 = vrot.slane %v334, 1
      %v473 = vsel %vm428, %v470, %v472
      %v474 = vrot.slane %v335, 1
      %v475 = vrot.slane %v336, 1
      %v476 = vsel %vm428, %v474, %v475
      %v477 = vrot.slane %v337, 1
      %v478 = vsel %vm428, %v475, %v477
      %v479 = vrot.slane %v338, 1
      %v480 = vrot.slane %v339, 1
      %v481 = vsel %vm428, %v479, %v480
      %v482 = vrot.slane %v340, 1
      %v483 = vsel %vm428, %v480, %v482
      %v484 = vrot.slane %v341, 1
      %v485 = vrot.slane %v342, 1
      %v486 = vsel %vm428, %v484, %v485
      %v487 = vrot.slane %v343, 1
      %v488 = vsel %vm428, %v485, %v487
      %v489 = vrot.slane %v344, 1
      %v490 = vrot.slane %v345, 1
      %v491 = vsel %vm428, %v489, %v490
      %v492 = vrot.slane %v346, 1
      %v493 = vsel %vm428, %v490, %v492
      %v494 = vrot.slane %v347, 1
      %v495 = vrot.slane %v348, 1
      %v496 = vsel %vm428, %v494, %v495
      %v497 = vrot.slane %v349, 1
      %v498 = vsel %vm428, %v495, %v497
      %v499 = vrot.slane %v350, 1
      %v500 = vrot.slane %v351, 1
      %v501 = vsel %vm428, %v499, %v500
      %v502 = vrot.slane %v352, 1
      %v503 = vsel %vm428, %v500, %v502
      %v504 = vrot.slane %v353, 1
      %v505 = vrot.slane %v354, 1
      %v506 = vsel %vm428, %v504, %v505
      %v507 = vrot.slane %v355, 1
      %v508 = vsel %vm428, %v505, %v507
      %v509 = vrot.slane %v356, 1
      %v510 = vrot.slane %v357, 1
      %v511 = vsel %vm428, %v509, %v510
      %v512 = vrot.slane %v358, 1
      %v513 = vsel %vm428, %v510, %v512
      %v514 = vrot.slane %v359, 1
      %v515 = vrot.slane %v360, 1
      %v516 = vsel %vm428, %v514, %v515
      %v517 = vrot.slane %v361, 1
      %v518 = vsel %vm428, %v515, %v517
      %v519 = vrot.slane %v362, 1
      %v520 = vrot.slane %v363, 1
      %v521 = vsel %vm428, %v519, %v520
      %v522 = vrot.slane %v364, 1
      %v523 = vsel %vm428, %v520, %v522
      %v524 = vrot.slane %v365, 1
      %v525 = vrot.slane %v366, 1
      %v526 = vsel %vm428, %v524, %v525
      %v527 = vrot.slane %v367, 1
      %v528 = vsel %vm428, %v525, %v527
      %v569 = vmax.f32 %v308, %v431
      %v570 = vmax.f32 %v309, %v433
      %v571 = vmax.f32 %v311, %v436
      %v572 = vmax.f32 %v312, %v438
      %v573 = vmax.f32 %v314, %v441
      %v574 = vmax.f32 %v315, %v443
      %v575 = vmax.f32 %v317, %v446
      %v576 = vmax.f32 %v318, %v448
      %v577 = vmax.f32 %v320, %v451
      %v578 = vmax.f32 %v321, %v453
      %v579 = vmax.f32 %v323, %v456
      %v580 = vmax.f32 %v324, %v458
      %v581 = vmax.f32 %v326, %v461
      %v582 = vmax.f32 %v327, %v463
      %v583 = vmax.f32 %v329, %v466
      %v584 = vmax.f32 %v330, %v468
      %v585 = vmax.f32 %v332, %v471
      %v586 = vmax.f32 %v333, %v473
      %v587 = vmax.f32 %v335, %v476
      %v588 = vmax.f32 %v336, %v478
      %v589 = vmax.f32 %v338, %v481
      %v590 = vmax.f32 %v339, %v483
      %v591 = vmax.f32 %v341, %v486
      %v592 = vmax.f32 %v342, %v488
      %v593 = vmax.f32 %v344, %v491
      %v594 = vmax.f32 %v345, %v493
      %v595 = vmax.f32 %v347, %v496
      %v596 = vmax.f32 %v348, %v498
      %v597 = vmax.f32 %v350, %v501
      %v598 = vmax.f32 %v351, %v503
      %v599 = vmax.f32 %v353, %v506
      %v600 = vmax.f32 %v354, %v508
      %v601 = vmax.f32 %v356, %v511
      %v602 = vmax.f32 %v357, %v513
      %v603 = vmax.f32 %v359, %v516
      %v604 = vmax.f32 %v360, %v518
      %v605 = vmax.f32 %v362, %v521
      %v606 = vmax.f32 %v363, %v523
      %v607 = vmax.f32 %v365, %v526
      %v608 = vmax.f32 %v366, %v528
      %vm609 = vcmask 1045504
      %v610 = vrot.slane %v308, 2
      %v611 = vrot.slane %v309, 2
      %v612 = vsel %vm609, %v610, %v611
      %v613 = vrot.slane %v310, 2
      %v614 = vsel %vm609, %v611, %v613
      %v615 = vrot.slane %v311, 2
      %v616 = vrot.slane %v312, 2
      %v617 = vsel %vm609, %v615, %v616
      %v618 = vrot.slane %v313, 2
      %v619 = vsel %vm609, %v616, %v618
      %v620 = vrot.slane %v314, 2
      %v621 = vrot.slane %v315, 2
      %v622 = vsel %vm609, %v620, %v621
      %v623 = vrot.slane %v316, 2
      %v624 = vsel %vm609, %v621, %v623
      %v625 = vrot.slane %v317, 2
      %v626 = vrot.slane %v318, 2
      %v627 = vsel %vm609, %v625, %v626
      %v628 = vrot.slane %v319, 2
      %v629 = vsel %vm609, %v626, %v628
      %v630 = vrot.slane %v320, 2
      %v631 = vrot.slane %v321, 2
      %v632 = vsel %vm609, %v630, %v631
      %v633 = vrot.slane %v322, 2
      %v634 = vsel %vm609, %v631, %v633
      %v635 = vrot.slane %v323, 2
      %v636 = vrot.slane %v324, 2
      %v637 = vsel %vm609, %v635, %v636
      %v638 = vrot.slane %v325, 2
      %v639 = vsel %vm609, %v636, %v638
      %v640 = vrot.slane %v326, 2
      %v641 = vrot.slane %v327, 2
      %v642 = vsel %vm609, %v640, %v641
      %v643 = vrot.slane %v328, 2
      %v644 = vsel %vm609, %v641, %v643
      %v645 = vrot.slane %v329, 2
      %v646 = vrot.slane %v330, 2
      %v647 = vsel %vm609, %v645, %v646
      %v648 = vrot.slane %v331, 2
      %v649 = vsel %vm609, %v646, %v648
      %v650 = vrot.slane %v332, 2
      %v651 = vrot.slane %v333, 2
      %v652 = vsel %vm609, %v650, %v651
      %v653 = vrot.slane %v334, 2
      %v654 = vsel %vm609, %v651, %v653
      %v655 = vrot.slane %v335, 2
      %v656 = vrot.slane %v336, 2
      %v657 = vsel %vm609, %v655, %v656
      %v658 = vrot.slane %v337, 2
      %v659 = vsel %vm609, %v656, %v658
      %v660 = vrot.slane %v338, 2
      %v661 = vrot.slane %v339, 2
      %v662 = vsel %vm609, %v660, %v661
      %v663 = vrot.slane %v340, 2
      %v664 = vsel %vm609, %v661, %v663
      %v665 = vrot.slane %v341, 2
      %v666 = vrot.slane %v342, 2
      %v667 = vsel %vm609, %v665, %v666
      %v668 = vrot.slane %v343, 2
      %v669 = vsel %vm609, %v666, %v668
      %v670 = vrot.slane %v344, 2
      %v671 = vrot.slane %v345, 2
      %v672 = vsel %vm609, %v670, %v671
      %v673 = vrot.slane %v346, 2
      %v674 = vsel %vm609, %v671, %v673
      %v675 = vrot.slane %v347, 2
      %v676 = vrot.slane %v348, 2
      %v677 = vsel %vm609, %v675, %v676
      %v678 = vrot.slane %v349, 2
      %v679 = vsel %vm609, %v676, %v678
      %v680 = vrot.slane %v350, 2
      %v681 = vrot.slane %v351, 2
      %v682 = vsel %vm609, %v680, %v681
      %v683 = vrot.slane %v352, 2
      %v684 = vsel %vm609, %v681, %v683
      %v685 = vrot.slane %v353, 2
      %v686 = vrot.slane %v354, 2
      %v687 = vsel %vm609, %v685, %v686
      %v688 = vrot.slane %v355, 2
      %v689 = vsel %vm609, %v686, %v688
      %v690 = vrot.slane %v356, 2
      %v691 = vrot.slane %v357, 2
      %v692 = vsel %vm609, %v690, %v691
      %v693 = vrot.slane %v358, 2
      %v694 = vsel %vm609, %v691, %v693
      %v695 = vrot.slane %v359, 2
      %v696 = vrot.slane %v360, 2
      %v697 = vsel %vm609, %v695, %v696
      %v698 = vrot.slane %v361, 2
      %v699 = vsel %vm609, %v696, %v698
      %v700 = vrot.slane %v362, 2
      %v701 = vrot.slane %v363, 2
      %v702 = vsel %vm609, %v700, %v701
      %v703 = vrot.slane %v364, 2
      %v704 = vsel %vm609, %v701, %v703
      %v705 = vrot.slane %v365, 2
      %v706 = vrot.slane %v366, 2
      %v707 = vsel %vm609, %v705, %v706
      %v708 = vrot.slane %v367, 2
      %v709 = vsel %vm609, %v706, %v708
      %v750 = vmax.f32 %v569, %v612
      %v751 = vmax.f32 %v570, %v614
      %v752 = vmax.f32 %v571, %v617
      %v753 = vmax.f32 %v572, %v619
      %v754 = vmax.f32 %v573, %v622
      %v755 = vmax.f32 %v574, %v624
      %v756 = vmax.f32 %v575, %v627
      %v757 = vmax.f32 %v576, %v629
      %v758 = vmax.f32 %v577, %v632
      %v759 = vmax.f32 %v578, %v634
      %v760 = vmax.f32 %v579, %v637
      %v761 = vmax.f32 %v580, %v639
      %v762 = vmax.f32 %v581, %v642
      %v763 = vmax.f32 %v582, %v644
      %v764 = vmax.f32 %v583, %v647
      %v765 = vmax.f32 %v584, %v649
      %v766 = vmax.f32 %v585, %v652
      %v767 = vmax.f32 %v586, %v654
      %v768 = vmax.f32 %v587, %v657
      %v769 = vmax.f32 %v588, %v659
      %v770 = vmax.f32 %v589, %v662
      %v771 = vmax.f32 %v590, %v664
      %v772 = vmax.f32 %v591, %v667
      %v773 = vmax.f32 %v592, %v669
      %v774 = vmax.f32 %v593, %v672
      %v775 = vmax.f32 %v594, %v674
      %v776 = vmax.f32 %v595, %v677
      %v777 = vmax.f32 %v596, %v679
      %v778 = vmax.f32 %v597, %v682
      %v779 = vmax.f32 %v598, %v684
      %v780 = vmax.f32 %v599, %v687
      %v781 = vmax.f32 %v600, %v689
      %v782 = vmax.f32 %v601, %v692
      %v783 = vmax.f32 %v602, %v694
      %v784 = vmax.f32 %v603, %v697
      %v785 = vmax.f32 %v604, %v699
      %v786 = vmax.f32 %v605, %v702
      %v787 = vmax.f32 %v606, %v704
      %v788 = vmax.f32 %v607, %v707
      %v789 = vmax.f32 %v608, %v709
      %vm790 = vcmask 1044480
      %v791 = vrot.slane %v308, 3
      %v792 = vrot.slane %v309, 3
      %v793 = vsel %vm790, %v791, %v792
      %v794 = vrot.slane %v310, 3
      %v795 = vsel %vm790, %v792, %v794
      %v796 = vrot.slane %v311, 3
      %v797 = vrot.slane %v312, 3
      %v798 = vsel %vm790, %v796, %v797
      %v799 = vrot.slane %v313, 3
      %v800 = vsel %vm790, %v797, %v799
      %v801 = vrot.slane %v314, 3
      %v802 = vrot.slane %v315, 3
      %v803 = vsel %vm790, %v801, %v802
      %v804 = vrot.slane %v316, 3
      %v805 = vsel %vm790, %v802, %v804
      %v806 = vrot.slane %v317, 3
      %v807 = vrot.slane %v318, 3
      %v808 = vsel %vm790, %v806, %v807
      %v809 = vrot.slane %v319, 3
      %v810 = vsel %vm790, %v807, %v809
      %v811 = vrot.slane %v320, 3
      %v812 = vrot.slane %v321, 3
      %v813 = vsel %vm790, %v811, %v812
      %v814 = vrot.slane %v322, 3
      %v815 = vsel %vm790, %v812, %v814
      %v816 = vrot.slane %v323, 3
      %v817 = vrot.slane %v324, 3
      %v818 = vsel %vm790, %v816, %v817
      %v819 = vrot.slane %v325, 3
      %v820 = vsel %vm790, %v817, %v819
      %v821 = vrot.slane %v326, 3
      %v822 = vrot.slane %v327, 3
      %v823 = vsel %vm790, %v821, %v822
      %v824 = vrot.slane %v328, 3
      %v825 = vsel %vm790, %v822, %v824
      %v826 = vrot.slane %v329, 3
      %v827 = vrot.slane %v330, 3
      %v828 = vsel %vm790, %v826, %v827
      %v829 = vrot.slane %v331, 3
      %v830 = vsel %vm790, %v827, %v829
      %v831 = vrot.slane %v332, 3
      %v832 = vrot.slane %v333, 3
      %v833 = vsel %vm790, %v831, %v832
      %v834 = vrot.slane %v334, 3
      %v835 = vsel %vm790, %v832, %v834
      %v836 = vrot.slane %v335, 3
      %v837 = vrot.slane %v336, 3
      %v838 = vsel %vm790, %v836, %v837
      %v839 = vrot.slane %v337, 3
      %v840 = vsel %vm790, %v837, %v839
      %v841 = vrot.slane %v338, 3
      %v842 = vrot.slane %v339, 3
      %v843 = vsel %vm790, %v841, %v842
      %v844 = vrot.slane %v340, 3
      %v845 = vsel %vm790, %v842, %v844
      %v846 = vrot.slane %v341, 3
      %v847 = vrot.slane %v342, 3
      %v848 = vsel %vm790, %v846, %v847
      %v849 = vrot.slane %v343, 3
      %v850 = vsel %vm790, %v847, %v849
      %v851 = vrot.slane %v344, 3
      %v852 = vrot.slane %v345, 3
      %v853 = vsel %vm790, %v851, %v852
      %v854 = vrot.slane %v346, 3
      %v855 = vsel %vm790, %v852, %v854
      %v856 = vrot.slane %v347, 3
      %v857 = vrot.slane %v348, 3
      %v858 = vsel %vm790, %v856, %v857
      %v859 = vrot.slane %v349, 3
      %v860 = vsel %vm790, %v857, %v859
      %v861 = vrot.slane %v350, 3
      %v862 = vrot.slane %v351, 3
      %v863 = vsel %vm790, %v861, %v862
      %v864 = vrot.slane %v352, 3
      %v865 = vsel %vm790, %v862, %v864
      %v866 = vrot.slane %v353, 3
      %v867 = vrot.slane %v354, 3
      %v868 = vsel %vm790, %v866, %v867
      %v869 = vrot.slane %v355, 3
      %v870 = vsel %vm790, %v867, %v869
      %v871 = vrot.slane %v356, 3
      %v872 = vrot.slane %v357, 3
      %v873 = vsel %vm790, %v871, %v872
      %v874 = vrot.slane %v358, 3
      %v875 = vsel %vm790, %v872, %v874
      %v876 = vrot.slane %v359, 3
      %v877 = vrot.slane %v360, 3
      %v878 = vsel %vm790, %v876, %v877
      %v879 = vrot.slane %v361, 3
      %v880 = vsel %vm790, %v877, %v879
      %v881 = vrot.slane %v362, 3
      %v882 = vrot.slane %v363, 3
      %v883 = vsel %vm790, %v881, %v882
      %v884 = vrot.slane %v364, 3
      %v885 = vsel %vm790, %v882, %v884
      %v886 = vrot.slane %v365, 3
      %v887 = vrot.slane %v366, 3
      %v888 = vsel %vm790, %v886, %v887
      %v889 = vrot.slane %v367, 3
      %v890 = vsel %vm790, %v887, %v889
      %v931 = vmax.f32 %v750, %v793
      %v932 = vmax.f32 %v751, %v795
      %v933 = vmax.f32 %v752, %v798
      %v934 = vmax.f32 %v753, %v800
      %v935 = vmax.f32 %v754, %v803
      %v936 = vmax.f32 %v755, %v805
      %v937 = vmax.f32 %v756, %v808
      %v938 = vmax.f32 %v757, %v810
      %v939 = vmax.f32 %v758, %v813
      %v940 = vmax.f32 %v759, %v815
      %v941 = vmax.f32 %v760, %v818
      %v942 = vmax.f32 %v761, %v820
      %v943 = vmax.f32 %v762, %v823
      %v944 = vmax.f32 %v763, %v825
      %v945 = vmax.f32 %v764, %v828
      %v946 = vmax.f32 %v765, %v830
      %v947 = vmax.f32 %v766, %v833
      %v948 = vmax.f32 %v767, %v835
      %v949 = vmax.f32 %v768, %v838
      %v950 = vmax.f32 %v769, %v840
      %v951 = vmax.f32 %v770, %v843
      %v952 = vmax.f32 %v771, %v845
      %v953 = vmax.f32 %v772, %v848
      %v954 = vmax.f32 %v773, %v850
      %v955 = vmax.f32 %v774, %v853
      %v956 = vmax.f32 %v775, %v855
      %v957 = vmax.f32 %v776, %v858
      %v958 = vmax.f32 %v777, %v860
      %v959 = vmax.f32 %v778, %v863
      %v960 = vmax.f32 %v779, %v865
      %v961 = vmax.f32 %v780, %v868
      %v962 = vmax.f32 %v781, %v870
      %v963 = vmax.f32 %v782, %v873
      %v964 = vmax.f32 %v783, %v875
      %v965 = vmax.f32 %v784, %v878
      %v966 = vmax.f32 %v785, %v880
      %v967 = vmax.f32 %v786, %v883
      %v968 = vmax.f32 %v787, %v885
      %v969 = vmax.f32 %v788, %v888
      %v970 = vmax.f32 %v789, %v890
      %vm971 = vcmask 1043456
      %v972 = vrot.slane %v308, 4
      %v973 = vrot.slane %v309, 4
      %v974 = vsel %vm971, %v972, %v973
      %v975 = vrot.slane %v310, 4
      %v976 = vsel %vm971, %v973, %v975
      %v977 = vrot.slane %v311, 4
      %v978 = vrot.slane %v312, 4
      %v979 = vsel %vm971, %v977, %v978
      %v980 = vrot.slane %v313, 4
      %v981 = vsel %vm971, %v978, %v980
      %v982 = vrot.slane %v314, 4
      %v983 = vrot.slane %v315, 4
      %v984 = vsel %vm971, %v982, %v983
      %v985 = vrot.slane %v316, 4
      %v986 = vsel %vm971, %v983, %v985
      %v987 = vrot.slane %v317, 4
      %v988 = vrot.slane %v318, 4
      %v989 = vsel %vm971, %v987, %v988
      %v990 = vrot.slane %v319, 4
      %v991 = vsel %vm971, %v988, %v990
      %v992 = vrot.slane %v320, 4
      %v993 = vrot.slane %v321, 4
      %v994 = vsel %vm971, %v992, %v993
      %v995 = vrot.slane %v322, 4
      %v996 = vsel %vm971, %v993, %v995
      %v997 = vrot.slane %v323, 4
      %v998 = vrot.slane %v324, 4
      %v999 = vsel %vm971, %v997, %v998
      %v1000 = vrot.slane %v325, 4
      %v1001 = vsel %vm971, %v998, %v1000
      %v1002 = vrot.slane %v326, 4
      %v1003 = vrot.slane %v327, 4
      %v1004 = vsel %vm971, %v1002, %v1003
      %v1005 = vrot.slane %v328, 4
      %v1006 = vsel %vm971, %v1003, %v1005
      %v1007 = vrot.slane %v329, 4
      %v1008 = vrot.slane %v330, 4
      %v1009 = vsel %vm971, %v1007, %v1008
      %v1010 = vrot.slane %v331, 4
      %v1011 = vsel %vm971, %v1008, %v1010
      %v1012 = vrot.slane %v332, 4
      %v1013 = vrot.slane %v333, 4
      %v1014 = vsel %vm971, %v1012, %v1013
      %v1015 = vrot.slane %v334, 4
      %v1016 = vsel %vm971, %v1013, %v1015
      %v1017 = vrot.slane %v335, 4
      %v1018 = vrot.slane %v336, 4
      %v1019 = vsel %vm971, %v1017, %v1018
      %v1020 = vrot.slane %v337, 4
      %v1021 = vsel %vm971, %v1018, %v1020
      %v1022 = vrot.slane %v338, 4
      %v1023 = vrot.slane %v339, 4
      %v1024 = vsel %vm971, %v1022, %v1023
      %v1025 = vrot.slane %v340, 4
      %v1026 = vsel %vm971, %v1023, %v1025
      %v1027 = vrot.slane %v341, 4
      %v1028 = vrot.slane %v342, 4
      %v1029 = vsel %vm971, %v1027, %v1028
      %v1030 = vrot.slane %v343, 4
      %v1031 = vsel %vm971, %v1028, %v1030
      %v1032 = vrot.slane %v344, 4
      %v1033 = vrot.slane %v345, 4
      %v1034 = vsel %vm971, %v1032, %v1033
      %v1035 = vrot.slane %v346, 4
      %v1036 = vsel %vm971, %v1033, %v1035
      %v1037 = vrot.slane %v347, 4
      %v1038 = vrot.slane %v348, 4
      %v1039 = vsel %vm971, %v1037, %v1038
      %v1040 = vrot.slane %v349, 4
      %v1041 = vsel %vm971, %v1038, %v1040
      %v1042 = vrot.slane %v350, 4
      %v1043 = vrot.slane %v351, 4
      %v1044 = vsel %vm971, %v1042, %v1043
      %v1045 = vrot.slane %v352, 4
      %v1046 = vsel %vm971, %v1043, %v1045
      %v1047 = vrot.slane %v353, 4
      %v1048 = vrot.slane %v354, 4
      %v1049 = vsel %vm971, %v1047, %v1048
      %v1050 = vrot.slane %v355, 4
      %v1051 = vsel %vm971, %v1048, %v1050
      %v1052 = vrot.slane %v356, 4
      %v1053 = vrot.slane %v357, 4
      %v1054 = vsel %vm971, %v1052, %v1053
      %v1055 = vrot.slane %v358, 4
      %v1056 = vsel %vm971, %v1053, %v1055
      %v1057 = vrot.slane %v359, 4
      %v1058 = vrot.slane %v360, 4
      %v1059 = vsel %vm971, %v1057, %v1058
      %v1060 = vrot.slane %v361, 4
      %v1061 = vsel %vm971, %v1058, %v1060
      %v1062 = vrot.slane %v362, 4
      %v1063 = vrot.slane %v363, 4
      %v1064 = vsel %vm971, %v1062, %v1063
      %v1065 = vrot.slane %v364, 4
      %v1066 = vsel %vm971, %v1063, %v1065
      %v1067 = vrot.slane %v365, 4
      %v1068 = vrot.slane %v366, 4
      %v1069 = vsel %vm971, %v1067, %v1068
      %v1070 = vrot.slane %v367, 4
      %v1071 = vsel %vm971, %v1068, %v1070
      %v1112 = vmax.f32 %v931, %v974
      %v1113 = vmax.f32 %v932, %v976
      %v1114 = vmax.f32 %v933, %v979
      %v1115 = vmax.f32 %v934, %v981
      %v1116 = vmax.f32 %v935, %v984
      %v1117 = vmax.f32 %v936, %v986
      %v1118 = vmax.f32 %v937, %v989
      %v1119 = vmax.f32 %v938, %v991
      %v1120 = vmax.f32 %v939, %v994
      %v1121 = vmax.f32 %v940, %v996
      %v1122 = vmax.f32 %v941, %v999
      %v1123 = vmax.f32 %v942, %v1001
      %v1124 = vmax.f32 %v943, %v1004
      %v1125 = vmax.f32 %v944, %v1006
      %v1126 = vmax.f32 %v945, %v1009
      %v1127 = vmax.f32 %v946, %v1011
      %v1128 = vmax.f32 %v947, %v1014
      %v1129 = vmax.f32 %v948, %v1016
      %v1130 = vmax.f32 %v949, %v1019
      %v1131 = vmax.f32 %v950, %v1021
      %v1132 = vmax.f32 %v951, %v1024
      %v1133 = vmax.f32 %v952, %v1026
      %v1134 = vmax.f32 %v953, %v1029
      %v1135 = vmax.f32 %v954, %v1031
      %v1136 = vmax.f32 %v955, %v1034
      %v1137 = vmax.f32 %v956, %v1036
      %v1138 = vmax.f32 %v957, %v1039
      %v1139 = vmax.f32 %v958, %v1041
      %v1140 = vmax.f32 %v959, %v1044
      %v1141 = vmax.f32 %v960, %v1046
      %v1142 = vmax.f32 %v961, %v1049
      %v1143 = vmax.f32 %v962, %v1051
      %v1144 = vmax.f32 %v963, %v1054
      %v1145 = vmax.f32 %v964, %v1056
      %v1146 = vmax.f32 %v965, %v1059
      %v1147 = vmax.f32 %v966, %v1061
      %v1148 = vmax.f32 %v967, %v1064
      %v1149 = vmax.f32 %v968, %v1066
      %v1150 = vmax.f32 %v969, %v1069
      %v1151 = vmax.f32 %v970, %v1071
      %v1152 = vmax.f32 %v1112, %v1114
      %v1153 = vmax.f32 %v1113, %v1115
      %v1154 = vmax.f32 %v1114, %v1116
      %v1155 = vmax.f32 %v1115, %v1117
      %v1156 = vmax.f32 %v1116, %v1118
      %v1157 = vmax.f32 %v1117, %v1119
      %v1158 = vmax.f32 %v1118, %v1120
      %v1159 = vmax.f32 %v1119, %v1121
      %v1160 = vmax.f32 %v1120, %v1122
      %v1161 = vmax.f32 %v1121, %v1123
      %v1162 = vmax.f32 %v1122, %v1124
      %v1163 = vmax.f32 %v1123, %v1125
      %v1164 = vmax.f32 %v1124, %v1126
      %v1165 = vmax.f32 %v1125, %v1127
      %v1166 = vmax.f32 %v1126, %v1128
      %v1167 = vmax.f32 %v1127, %v1129
      %v1168 = vmax.f32 %v1128, %v1130
      %v1169 = vmax.f32 %v1129, %v1131
      %v1170 = vmax.f32 %v1130, %v1132
      %v1171 = vmax.f32 %v1131, %v1133
      %v1172 = vmax.f32 %v1132, %v1134
      %v1173 = vmax.f32 %v1133, %v1135
      %v1174 = vmax.f32 %v1134, %v1136
      %v1175 = vmax.f32 %v1135, %v1137
      %v1176 = vmax.f32 %v1136, %v1138
      %v1177 = vmax.f32 %v1137, %v1139
      %v1178 = vmax.f32 %v1138, %v1140
      %v1179 = vmax.f32 %v1139, %v1141
      %v1180 = vmax.f32 %v1140, %v1142
      %v1181 = vmax.f32 %v1141, %v1143
      %v1182 = vmax.f32 %v1142, %v1144
      %v1183 = vmax.f32 %v1143, %v1145
      %v1184 = vmax.f32 %v1152, %v1116
      %v1185 = vmax.f32 %v1153, %v1117
      %v1186 = vmax.f32 %v1154, %v1118
      %v1187 = vmax.f32 %v1155, %v1119
      %v1188 = vmax.f32 %v1156, %v1120
      %v1189 = vmax.f32 %v1157, %v1121
      %v1190 = vmax.f32 %v1158, %v1122
      %v1191 = vmax.f32 %v1159, %v1123
      %v1192 = vmax.f32 %v1160, %v1124
      %v1193 = vmax.f32 %v1161, %v1125
      %v1194 = vmax.f32 %v1162, %v1126
      %v1195 = vmax.f32 %v1163, %v1127
      %v1196 = vmax.f32 %v1164, %v1128
      %v1197 = vmax.f32 %v1165, %v1129
      %v1198 = vmax.f32 %v1166, %v1130
      %v1199 = vmax.f32 %v1167, %v1131
      %v1200 = vmax.f32 %v1168, %v1132
      %v1201 = vmax.f32 %v1169, %v1133
      %v1202 = vmax.f32 %v1170, %v1134
      %v1203 = vmax.f32 %v1171, %v1135
      %v1204 = vmax.f32 %v1172, %v1136
      %v1205 = vmax.f32 %v1173, %v1137
      %v1206 = vmax.f32 %v1174, %v1138
      %v1207 = vmax.f32 %v1175, %v1139
      %v1208 = vmax.f32 %v1176, %v1140
      %v1209 = vmax.f32 %v1177, %v1141
      %v1210 = vmax.f32 %v1178, %v1142
      %v1211 = vmax.f32 %v1179, %v1143
      %v1212 = vmax.f32 %v1180, %v1144
      %v1213 = vmax.f32 %v1181, %v1145
      %v1214 = vmax.f32 %v1182, %v1146
      %v1215 = vmax.f32 %v1183, %v1147
      %v1216 = vmax.f32 %v1184, %v1118
      %v1217 = vmax.f32 %v1185, %v1119
      %v1218 = vmax.f32 %v1186, %v1120
      %v1219 = vmax.f32 %v1187, %v1121
      %v1220 = vmax.f32 %v1188, %v1122
      %v1221 = vmax.f32 %v1189, %v1123
      %v1222 = vmax.f32 %v1190, %v1124
      %v1223 = vmax.f32 %v1191, %v1125
      %v1224 = vmax.f32 %v1192, %v1126
      %v1225 = vmax.f32 %v1193, %v1127
      %v1226 = vmax.f32 %v1194, %v1128
      %v1227 = vmax.f32 %v1195, %v1129
      %v1228 = vmax.f32 %v1196, %v1130
      %v1229 = vmax.f32 %v1197, %v1131
      %v1230 = vmax.f32 %v1198, %v1132
      %v1231 = vmax.f32 %v1199, %v1133
      %v1232 = vmax.f32 %v1200, %v1134
      %v1233 = vmax.f32 %v1201, %v1135
      %v1234 = vmax.f32 %v1202, %v1136
      %v1235 = vmax.f32 %v1203, %v1137
      %v1236 = vmax.f32 %v1204, %v1138
      %v1237 = vmax.f32 %v1205, %v1139
      %v1238 = vmax.f32 %v1206, %v1140
      %v1239 = vmax.f32 %v1207, %v1141
      %v1240 = vmax.f32 %v1208, %v1142
      %v1241 = vmax.f32 %v1209, %v1143
      %v1242 = vmax.f32 %v1210, %v1144
      %v1243 = vmax.f32 %v1211, %v1145
      %v1244 = vmax.f32 %v1212, %v1146
      %v1245 = vmax.f32 %v1213, %v1147
      %v1246 = vmax.f32 %v1214, %v1148
      %v1247 = vmax.f32 %v1215, %v1149
      %v1248 = vmax.f32 %v1216, %v1120
      %v1249 = vmax.f32 %v1217, %v1121
      %v1250 = vmax.f32 %v1218, %v1122
      %v1251 = vmax.f32 %v1219, %v1123
      %v1252 = vmax.f32 %v1220, %v1124
      %v1253 = vmax.f32 %v1221, %v1125
      %v1254 = vmax.f32 %v1222, %v1126
      %v1255 = vmax.f32 %v1223, %v1127
      %v1256 = vmax.f32 %v1224, %v1128
      %v1257 = vmax.f32 %v1225, %v1129
      %v1258 = vmax.f32 %v1226, %v1130
      %v1259 = vmax.f32 %v1227, %v1131
      %v1260 = vmax.f32 %v1228, %v1132
      %v1261 = vmax.f32 %v1229, %v1133
      %v1262 = vmax.f32 %v1230, %v1134
      %v1263 = vmax.f32 %v1231, %v1135
      %v1264 = vmax.f32 %v1232, %v1136
      %v1265 = vmax.f32 %v1233, %v1137
      %v1266 = vmax.f32 %v1234, %v1138
      %v1267 = vmax.f32 %v1235, %v1139
      %v1268 = vmax.f32 %v1236, %v1140
      %v1269 = vmax.f32 %v1237, %v1141
      %v1270 = vmax.f32 %v1238, %v1142
      %v1271 = vmax.f32 %v1239, %v1143
      %v1272 = vmax.f32 %v1240, %v1144
      %v1273 = vmax.f32 %v1241, %v1145
      %v1274 = vmax.f32 %v1242, %v1146
      %v1275 = vmax.f32 %v1243, %v1147
      %v1276 = vmax.f32 %v1244, %v1148
      %v1277 = vmax.f32 %v1245, %v1149
      %v1278 = vmax.f32 %v1246, %v1150
      %v1279 = vmax.f32 %v1247, %v1151
      %s1280 = scalar_lea.vmem %s147, 512
      %1281 = vst.msk [vmem:[%s1280] sm:$0xff] %vm181, %v1248
      %1282 = vst.msk [vmem:[%s1280 + $0x8] sm:$0xff] %vm181, %v1249
      %1283 = vst.msk [vmem:[%s1280 + $0x10] sm:$0xff] %vm181, %v1250
      %1284 = vst.msk [vmem:[%s1280 + $0x18] sm:$0xff] %vm181, %v1251
      %1285 = vst.msk [vmem:[%s1280 + $0x20] sm:$0xff] %vm181, %v1252
      %1286 = vst.msk [vmem:[%s1280 + $0x28] sm:$0xff] %vm181, %v1253
      %1287 = vst.msk [vmem:[%s1280 + $0x30] sm:$0xff] %vm181, %v1254
      %1288 = vst.msk [vmem:[%s1280 + $0x38] sm:$0xff] %vm181, %v1255
      %1289 = vst.msk [vmem:[%s1280 + $0x40] sm:$0xff] %vm181, %v1256
      %1290 = vst.msk [vmem:[%s1280 + $0x48] sm:$0xff] %vm181, %v1257
      %1291 = vst.msk [vmem:[%s1280 + $0x50] sm:$0xff] %vm181, %v1258
      %1292 = vst.msk [vmem:[%s1280 + $0x58] sm:$0xff] %vm181, %v1259
      %1293 = vst.msk [vmem:[%s1280 + $0x60] sm:$0xff] %vm181, %v1260
      %1294 = vst.msk [vmem:[%s1280 + $0x68] sm:$0xff] %vm181, %v1261
      %1295 = vst.msk [vmem:[%s1280 + $0x70] sm:$0xff] %vm181, %v1262
      %1296 = vst.msk [vmem:[%s1280 + $0x78] sm:$0xff] %vm181, %v1263
      %1297 = vst.msk [vmem:[%s1280 + $0x80] sm:$0xff] %vm181, %v1264
      %1298 = vst.msk [vmem:[%s1280 + $0x88] sm:$0xff] %vm181, %v1265
      %1299 = vst.msk [vmem:[%s1280 + $0x90] sm:$0xff] %vm181, %v1266
      %1300 = vst.msk [vmem:[%s1280 + $0x98] sm:$0xff] %vm181, %v1267
      %1301 = vst.msk [vmem:[%s1280 + $0xa0] sm:$0xff] %vm181, %v1268
      %1302 = vst.msk [vmem:[%s1280 + $0xa8] sm:$0xff] %vm181, %v1269
      %1303 = vst.msk [vmem:[%s1280 + $0xb0] sm:$0xff] %vm181, %v1270
      %1304 = vst.msk [vmem:[%s1280 + $0xb8] sm:$0xff] %vm181, %v1271
      %1305 = vst.msk [vmem:[%s1280 + $0xc0] sm:$0xff] %vm181, %v1272
      %1306 = vst.msk [vmem:[%s1280 + $0xc8] sm:$0xff] %vm181, %v1273
      %1307 = vst.msk [vmem:[%s1280 + $0xd0] sm:$0xff] %vm181, %v1274
      %1308 = vst.msk [vmem:[%s1280 + $0xd8] sm:$0xff] %vm181, %v1275
      %1309 = vst.msk [vmem:[%s1280 + $0xe0] sm:$0xff] %vm181, %v1276
      %1310 = vst.msk [vmem:[%s1280 + $0xe8] sm:$0xff] %vm181, %v1277
      %1311 = vst.msk [vmem:[%s1280 + $0xf0] sm:$0xff] %vm181, %v1278
      %1312 = vst.msk [vmem:[%s1280 + $0xf8] sm:$0xff] %vm181, %v1279
      %1313 = vst.msk [vmem:[%s275 + $0x2] sm:$0xff] %vm181, %v1248
      %1314 = vst.msk [vmem:[%s275 + $0xa] sm:$0xff] %vm181, %v1249
      %1315 = vst.msk [vmem:[%s275 + $0x1a] sm:$0xff] %vm181, %v1250
      %1316 = vst.msk [vmem:[%s275 + $0x22] sm:$0xff] %vm181, %v1251
      %1317 = vst.msk [vmem:[%s275 + $0x32] sm:$0xff] %vm181, %v1252
      %1318 = vst.msk [vmem:[%s275 + $0x3a] sm:$0xff] %vm181, %v1253
      %1319 = vst.msk [vmem:[%s275 + $0x4a] sm:$0xff] %vm181, %v1254
      %1320 = vst.msk [vmem:[%s275 + $0x52] sm:$0xff] %vm181, %v1255
      %1321 = vst.msk [vmem:[%s275 + $0x62] sm:$0xff] %vm181, %v1256
      %1322 = vst.msk [vmem:[%s275 + $0x6a] sm:$0xff] %vm181, %v1257
      %1323 = vst.msk [vmem:[%s275 + $0x7a] sm:$0xff] %vm181, %v1258
      %1324 = vst.msk [vmem:[%s275 + $0x82] sm:$0xff] %vm181, %v1259
      %1325 = vst.msk [vmem:[%s275 + $0x92] sm:$0xff] %vm181, %v1260
      %1326 = vst.msk [vmem:[%s275 + $0x9a] sm:$0xff] %vm181, %v1261
      %1327 = vst.msk [vmem:[%s275 + $0xaa] sm:$0xff] %vm181, %v1262
      %1328 = vst.msk [vmem:[%s275 + $0xb2] sm:$0xff] %vm181, %v1263
      %1329 = vst.msk [vmem:[%s275 + $0xc2] sm:$0xff] %vm181, %v1264
      %1330 = vst.msk [vmem:[%s275 + $0xca] sm:$0xff] %vm181, %v1265
      %1331 = vst.msk [vmem:[%s275 + $0xda] sm:$0xff] %vm181, %v1266
      %1332 = vst.msk [vmem:[%s275 + $0xe2] sm:$0xff] %vm181, %v1267
      %1333 = vst.msk [vmem:[%s275 + $0xf2] sm:$0xff] %vm181, %v1268
      %1334 = vst.msk [vmem:[%s275 + $0xfa] sm:$0xff] %vm181, %v1269
      %1335 = vst.msk [vmem:[%s275 + $0x10a] sm:$0xff] %vm181, %v1270
      %1336 = vst.msk [vmem:[%s275 + $0x112] sm:$0xff] %vm181, %v1271
      %1337 = vst.msk [vmem:[%s275 + $0x122] sm:$0xff] %vm181, %v1272
      %1338 = vst.msk [vmem:[%s275 + $0x12a] sm:$0xff] %vm181, %v1273
      %1339 = vst.msk [vmem:[%s275 + $0x13a] sm:$0xff] %vm181, %v1274
      %1340 = vst.msk [vmem:[%s275 + $0x142] sm:$0xff] %vm181, %v1275
      %1341 = vst.msk [vmem:[%s275 + $0x152] sm:$0xff] %vm181, %v1276
      %1342 = vst.msk [vmem:[%s275 + $0x15a] sm:$0xff] %vm181, %v1277
      %1343 = vst.msk [vmem:[%s275 + $0x16a] sm:$0xff] %vm181, %v1278
      %1344 = vst.msk [vmem:[%s275 + $0x172] sm:$0xff] %vm181, %v1279
      %v1345 = vld [vmem:[#allocation2] sm:$0xff]
      %v1346 = vld [vmem:[#allocation2 + $0x8] sm:$0xff]
      %v1347 = vld [vmem:[#allocation2 + $0x10] sm:$0xf]
      %v1348 = vld [vmem:[#allocation2 + $0x18] sm:$0xff]
      %v1349 = vld [vmem:[#allocation2 + $0x20] sm:$0xff]
      %v1350 = vld [vmem:[#allocation2 + $0x28] sm:$0xf]
      %v1351 = vld [vmem:[#allocation2 + $0x30] sm:$0xff]
      %v1352 = vld [vmem:[#allocation2 + $0x38] sm:$0xff]
      %v1353 = vld [vmem:[#allocation2 + $0x40] sm:$0xf]
      %v1354 = vld [vmem:[#allocation2 + $0x48] sm:$0xff]
      %v1355 = vld [vmem:[#allocation2 + $0x50] sm:$0xff]
      %v1356 = vld [vmem:[#allocation2 + $0x58] sm:$0xf]
      %v1357 = vld [vmem:[#allocation2 + $0x60] sm:$0xff]
      %v1358 = vld [vmem:[#allocation2 + $0x68] sm:$0xff]
      %v1359 = vld [vmem:[#allocation2 + $0x70] sm:$0xf]
      %v1360 = vld [vmem:[#allocation2 + $0x78] sm:$0xff]
      %v1361 = vld [vmem:[#allocation2 + $0x80] sm:$0xff]
      %v1362 = vld [vmem:[#allocation2 + $0x88] sm:$0xf]
      %v1363 = vld [vmem:[#allocation2 + $0x90] sm:$0xff]
      %v1364 = vld [vmem:[#allocation2 + $0x98] sm:$0xff]
      %v1365 = vld [vmem:[#allocation2 + $0xa0] sm:$0xf]
      %v1366 = vld [vmem:[#allocation2 + $0xa8] sm:$0xff]
      %v1367 = vld [vmem:[#allocation2 + $0xb0] sm:$0xff]
      %v1368 = vld [vmem:[#allocation2 + $0xb8] sm:$0xf]
      %v1369 = vld [vmem:[#allocation2 + $0xc0] sm:$0xff]
      %v1370 = vld [vmem:[#allocation2 + $0xc8] sm:$0xff]
      %v1371 = vld [vmem:[#allocation2 + $0xd0] sm:$0xf]
      %v1372 = vld [vmem:[#allocation2 + $0xd8] sm:$0xff]
      %v1373 = vld [vmem:[#allocation2 + $0xe0] sm:$0xff]
      %v1374 = vld [vmem:[#allocation2 + $0xe8] sm:$0xf]
      %v1375 = vld [vmem:[#allocation2 + $0xf0] sm:$0xff]
      %v1376 = vld [vmem:[#allocation2 + $0xf8] sm:$0xff]
      %v1377 = vld [vmem:[#allocation2 + $0x100] sm:$0xf]
      %v1378 = vld [vmem:[#allocation2 + $0x108] sm:$0xff]
      %v1379 = vld [vmem:[#allocation2 + $0x110] sm:$0xff]
      %v1380 = vld [vmem:[#allocation2 + $0x118] sm:$0xf]
      %v1381 = vld [vmem:[#allocation2 + $0x120] sm:$0xff]
      %v1382 = vld [vmem:[#allocation2 + $0x128] sm:$0xff]
      %v1383 = vld [vmem:[#allocation2 + $0x130] sm:$0xf]
      %v1384 = vld [vmem:[#allocation2 + $0x138] sm:$0xff]
      %v1385 = vld [vmem:[#allocation2 + $0x140] sm:$0xff]
      %v1386 = vld [vmem:[#allocation2 + $0x148] sm:$0xf]
      %v1387 = vld [vmem:[#allocation2 + $0x150] sm:$0xff]
      %v1388 = vld [vmem:[#allocation2 + $0x158] sm:$0xff]
      %v1389 = vld [vmem:[#allocation2 + $0x160] sm:$0xf]
      %v1390 = vld [vmem:[#allocation2 + $0x168] sm:$0xff]
      %v1391 = vld [vmem:[#allocation2 + $0x170] sm:$0xff]
      %v1392 = vld [vmem:[#allocation2 + $0x178] sm:$0xf]
      %v1393 = vld [vmem:[#allocation2 + $0x180] sm:$0xff]
      %v1394 = vld [vmem:[#allocation2 + $0x188] sm:$0xff]
      %v1395 = vld [vmem:[#allocation2 + $0x190] sm:$0xf]
      %v1396 = vld [vmem:[#allocation2 + $0x198] sm:$0xff]
      %v1397 = vld [vmem:[#allocation2 + $0x1a0] sm:$0xff]
      %v1398 = vld [vmem:[#allocation2 + $0x1a8] sm:$0xf]
      %v1399 = vld [vmem:[#allocation2 + $0x1b0] sm:$0xff]
      %v1400 = vld [vmem:[#allocation2 + $0x1b8] sm:$0xff]
      %v1401 = vld [vmem:[#allocation2 + $0x1c0] sm:$0xf]
      %v1402 = vld [vmem:[#allocation2 + $0x1c8] sm:$0xff]
      %v1403 = vld [vmem:[#allocation2 + $0x1d0] sm:$0xff]
      %v1404 = vld [vmem:[#allocation2 + $0x1d8] sm:$0xf]
      %v1465 = vrot.slane %v1345, 1
      %v1466 = vrot.slane %v1346, 1
      %v1467 = vsel %vm428, %v1465, %v1466
      %v1468 = vrot.slane %v1347, 1
      %v1469 = vsel %vm428, %v1466, %v1468
      %v1470 = vrot.slane %v1348, 1
      %v1471 = vrot.slane %v1349, 1
      %v1472 = vsel %vm428, %v1470, %v1471
      %v1473 = vrot.slane %v1350, 1
      %v1474 = vsel %vm428, %v1471, %v1473
      %v1475 = vrot.slane %v1351, 1
      %v1476 = vrot.slane %v1352, 1
      %v1477 = vsel %vm428, %v1475, %v1476
      %v1478 = vrot.slane %v1353, 1
      %v1479 = vsel %vm428, %v1476, %v1478
      %v1480 = vrot.slane %v1354, 1
      %v1481 = vrot.slane %v1355, 1
      %v1482 = vsel %vm428, %v1480, %v1481
      %v1483 = vrot.slane %v1356, 1
      %v1484 = vsel %vm428, %v1481, %v1483
      %v1485 = vrot.slane %v1357, 1
      %v1486 = vrot.slane %v1358, 1
      %v1487 = vsel %vm428, %v1485, %v1486
      %v1488 = vrot.slane %v1359, 1
      %v1489 = vsel %vm428, %v1486, %v1488
      %v1490 = vrot.slane %v1360, 1
      %v1491 = vrot.slane %v1361, 1
      %v1492 = vsel %vm428, %v1490, %v1491
      %v1493 = vrot.slane %v1362, 1
      %v1494 = vsel %vm428, %v1491, %v1493
      %v1495 = vrot.slane %v1363, 1
      %v1496 = vrot.slane %v1364, 1
      %v1497 = vsel %vm428, %v1495, %v1496
      %v1498 = vrot.slane %v1365, 1
      %v1499 = vsel %vm428, %v1496, %v1498
      %v1500 = vrot.slane %v1366, 1
      %v1501 = vrot.slane %v1367, 1
      %v1502 = vsel %vm428, %v1500, %v1501
      %v1503 = vrot.slane %v1368, 1
      %v1504 = vsel %vm428, %v1501, %v1503
      %v1505 = vrot.slane %v1369, 1
      %v1506 = vrot.slane %v1370, 1
      %v1507 = vsel %vm428, %v1505, %v1506
      %v1508 = vrot.slane %v1371, 1
      %v1509 = vsel %vm428, %v1506, %v1508
      %v1510 = vrot.slane %v1372, 1
      %v1511 = vrot.slane %v1373, 1
      %v1512 = vsel %vm428, %v1510, %v1511
      %v1513 = vrot.slane %v1374, 1
      %v1514 = vsel %vm428, %v1511, %v1513
      %v1515 = vrot.slane %v1375, 1
      %v1516 = vrot.slane %v1376, 1
      %v1517 = vsel %vm428, %v1515, %v1516
      %v1518 = vrot.slane %v1377, 1
      %v1519 = vsel %vm428, %v1516, %v1518
      %v1520 = vrot.slane %v1378, 1
      %v1521 = vrot.slane %v1379, 1
      %v1522 = vsel %vm428, %v1520, %v1521
      %v1523 = vrot.slane %v1380, 1
      %v1524 = vsel %vm428, %v1521, %v1523
      %v1525 = vrot.slane %v1381, 1
      %v1526 = vrot.slane %v1382, 1
      %v1527 = vsel %vm428, %v1525, %v1526
      %v1528 = vrot.slane %v1383, 1
      %v1529 = vsel %vm428, %v1526, %v1528
      %v1530 = vrot.slane %v1384, 1
      %v1531 = vrot.slane %v1385, 1
      %v1532 = vsel %vm428, %v1530, %v1531
      %v1533 = vrot.slane %v1386, 1
      %v1534 = vsel %vm428, %v1531, %v1533
      %v1535 = vrot.slane %v1387, 1
      %v1536 = vrot.slane %v1388, 1
      %v1537 = vsel %vm428, %v1535, %v1536
      %v1538 = vrot.slane %v1389, 1
      %v1539 = vsel %vm428, %v1536, %v1538
      %v1540 = vrot.slane %v1390, 1
      %v1541 = vrot.slane %v1391, 1
      %v1542 = vsel %vm428, %v1540, %v1541
      %v1543 = vrot.slane %v1392, 1
      %v1544 = vsel %vm428, %v1541, %v1543
      %v1545 = vrot.slane %v1393, 1
      %v1546 = vrot.slane %v1394, 1
      %v1547 = vsel %vm428, %v1545, %v1546
      %v1548 = vrot.slane %v1395, 1
      %v1549 = vsel %vm428, %v1546, %v1548
      %v1550 = vrot.slane %v1396, 1
      %v1551 = vrot.slane %v1397, 1
      %v1552 = vsel %vm428, %v1550, %v1551
      %v1553 = vrot.slane %v1398, 1
      %v1554 = vsel %vm428, %v1551, %v1553
      %v1555 = vrot.slane %v1399, 1
      %v1556 = vrot.slane %v1400, 1
      %v1557 = vsel %vm428, %v1555, %v1556
      %v1558 = vrot.slane %v1401, 1
      %v1559 = vsel %vm428, %v1556, %v1558
      %v1560 = vrot.slane %v1402, 1
      %v1561 = vrot.slane %v1403, 1
      %v1562 = vsel %vm428, %v1560, %v1561
      %v1563 = vrot.slane %v1404, 1
      %v1564 = vsel %vm428, %v1561, %v1563
      %v1605 = vmax.f32 %v1345, %v1467
      %v1606 = vmax.f32 %v1346, %v1469
      %v1607 = vmax.f32 %v1348, %v1472
      %v1608 = vmax.f32 %v1349, %v1474
      %v1609 = vmax.f32 %v1351, %v1477
      %v1610 = vmax.f32 %v1352, %v1479
      %v1611 = vmax.f32 %v1354, %v1482
      %v1612 = vmax.f32 %v1355, %v1484
      %v1613 = vmax.f32 %v1357, %v1487
      %v1614 = vmax.f32 %v1358, %v1489
      %v1615 = vmax.f32 %v1360, %v1492
      %v1616 = vmax.f32 %v1361, %v1494
      %v1617 = vmax.f32 %v1363, %v1497
      %v1618 = vmax.f32 %v1364, %v1499
      %v1619 = vmax.f32 %v1366, %v1502
      %v1620 = vmax.f32 %v1367, %v1504
      %v1621 = vmax.f32 %v1369, %v1507
      %v1622 = vmax.f32 %v1370, %v1509
      %v1623 = vmax.f32 %v1372, %v1512
      %v1624 = vmax.f32 %v1373, %v1514
      %v1625 = vmax.f32 %v1375, %v1517
      %v1626 = vmax.f32 %v1376, %v1519
      %v1627 = vmax.f32 %v1378, %v1522
      %v1628 = vmax.f32 %v1379, %v1524
      %v1629 = vmax.f32 %v1381, %v1527
      %v1630 = vmax.f32 %v1382, %v1529
      %v1631 = vmax.f32 %v1384, %v1532
      %v1632 = vmax.f32 %v1385, %v1534
      %v1633 = vmax.f32 %v1387, %v1537
      %v1634 = vmax.f32 %v1388, %v1539
      %v1635 = vmax.f32 %v1390, %v1542
      %v1636 = vmax.f32 %v1391, %v1544
      %v1637 = vmax.f32 %v1393, %v1547
      %v1638 = vmax.f32 %v1394, %v1549
      %v1639 = vmax.f32 %v1396, %v1552
      %v1640 = vmax.f32 %v1397, %v1554
      %v1641 = vmax.f32 %v1399, %v1557
      %v1642 = vmax.f32 %v1400, %v1559
      %v1643 = vmax.f32 %v1402, %v1562
      %v1644 = vmax.f32 %v1403, %v1564
      %v1645 = vrot.slane %v1345, 2
      %v1646 = vrot.slane %v1346, 2
      %v1647 = vsel %vm609, %v1645, %v1646
      %v1648 = vrot.slane %v1347, 2
      %v1649 = vsel %vm609, %v1646, %v1648
      %v1650 = vrot.slane %v1348, 2
      %v1651 = vrot.slane %v1349, 2
      %v1652 = vsel %vm609, %v1650, %v1651
      %v1653 = vrot.slane %v1350, 2
      %v1654 = vsel %vm609, %v1651, %v1653
      %v1655 = vrot.slane %v1351, 2
      %v1656 = vrot.slane %v1352, 2
      %v1657 = vsel %vm609, %v1655, %v1656
      %v1658 = vrot.slane %v1353, 2
      %v1659 = vsel %vm609, %v1656, %v1658
      %v1660 = vrot.slane %v1354, 2
      %v1661 = vrot.slane %v1355, 2
      %v1662 = vsel %vm609, %v1660, %v1661
      %v1663 = vrot.slane %v1356, 2
      %v1664 = vsel %vm609, %v1661, %v1663
      %v1665 = vrot.slane %v1357, 2
      %v1666 = vrot.slane %v1358, 2
      %v1667 = vsel %vm609, %v1665, %v1666
      %v1668 = vrot.slane %v1359, 2
      %v1669 = vsel %vm609, %v1666, %v1668
      %v1670 = vrot.slane %v1360, 2
      %v1671 = vrot.slane %v1361, 2
      %v1672 = vsel %vm609, %v1670, %v1671
      %v1673 = vrot.slane %v1362, 2
      %v1674 = vsel %vm609, %v1671, %v1673
      %v1675 = vrot.slane %v1363, 2
      %v1676 = vrot.slane %v1364, 2
      %v1677 = vsel %vm609, %v1675, %v1676
      %v1678 = vrot.slane %v1365, 2
      %v1679 = vsel %vm609, %v1676, %v1678
      %v1680 = vrot.slane %v1366, 2
      %v1681 = vrot.slane %v1367, 2
      %v1682 = vsel %vm609, %v1680, %v1681
      %v1683 = vrot.slane %v1368, 2
      %v1684 = vsel %vm609, %v1681, %v1683
      %v1685 = vrot.slane %v1369, 2
      %v1686 = vrot.slane %v1370, 2
      %v1687 = vsel %vm609, %v1685, %v1686
      %v1688 = vrot.slane %v1371, 2
      %v1689 = vsel %vm609, %v1686, %v1688
      %v1690 = vrot.slane %v1372, 2
      %v1691 = vrot.slane %v1373, 2
      %v1692 = vsel %vm609, %v1690, %v1691
      %v1693 = vrot.slane %v1374, 2
      %v1694 = vsel %vm609, %v1691, %v1693
      %v1695 = vrot.slane %v1375, 2
      %v1696 = vrot.slane %v1376, 2
      %v1697 = vsel %vm609, %v1695, %v1696
      %v1698 = vrot.slane %v1377, 2
      %v1699 = vsel %vm609, %v1696, %v1698
      %v1700 = vrot.slane %v1378, 2
      %v1701 = vrot.slane %v1379, 2
      %v1702 = vsel %vm609, %v1700, %v1701
      %v1703 = vrot.slane %v1380, 2
      %v1704 = vsel %vm609, %v1701, %v1703
      %v1705 = vrot.slane %v1381, 2
      %v1706 = vrot.slane %v1382, 2
      %v1707 = vsel %vm609, %v1705, %v1706
      %v1708 = vrot.slane %v1383, 2
      %v1709 = vsel %vm609, %v1706, %v1708
      %v1710 = vrot.slane %v1384, 2
      %v1711 = vrot.slane %v1385, 2
      %v1712 = vsel %vm609, %v1710, %v1711
      %v1713 = vrot.slane %v1386, 2
      %v1714 = vsel %vm609, %v1711, %v1713
      %v1715 = vrot.slane %v1387, 2
      %v1716 = vrot.slane %v1388, 2
      %v1717 = vsel %vm609, %v1715, %v1716
      %v1718 = vrot.slane %v1389, 2
      %v1719 = vsel %vm609, %v1716, %v1718
      %v1720 = vrot.slane %v1390, 2
      %v1721 = vrot.slane %v1391, 2
      %v1722 = vsel %vm609, %v1720, %v1721
      %v1723 = vrot.slane %v1392, 2
      %v1724 = vsel %vm609, %v1721, %v1723
      %v1725 = vrot.slane %v1393, 2
      %v1726 = vrot.slane %v1394, 2
      %v1727 = vsel %vm609, %v1725, %v1726
      %v1728 = vrot.slane %v1395, 2
      %v1729 = vsel %vm609, %v1726, %v1728
      %v1730 = vrot.slane %v1396, 2
      %v1731 = vrot.slane %v1397, 2
      %v1732 = vsel %vm609, %v1730, %v1731
      %v1733 = vrot.slane %v1398, 2
      %v1734 = vsel %vm609, %v1731, %v1733
      %v1735 = vrot.slane %v1399, 2
      %v1736 = vrot.slane %v1400, 2
      %v1737 = vsel %vm609, %v1735, %v1736
      %v1738 = vrot.slane %v1401, 2
      %v1739 = vsel %vm609, %v1736, %v1738
      %v1740 = vrot.slane %v1402, 2
      %v1741 = vrot.slane %v1403, 2
      %v1742 = vsel %vm609, %v1740, %v1741
      %v1743 = vrot.slane %v1404, 2
      %v1744 = vsel %vm609, %v1741, %v1743
      %v1785 = vmax.f32 %v1605, %v1647
      %v1786 = vmax.f32 %v1606, %v1649
      %v1787 = vmax.f32 %v1607, %v1652
      %v1788 = vmax.f32 %v1608, %v1654
      %v1789 = vmax.f32 %v1609, %v1657
      %v1790 = vmax.f32 %v1610, %v1659
      %v1791 = vmax.f32 %v1611, %v1662
      %v1792 = vmax.f32 %v1612, %v1664
      %v1793 = vmax.f32 %v1613, %v1667
      %v1794 = vmax.f32 %v1614, %v1669
      %v1795 = vmax.f32 %v1615, %v1672
      %v1796 = vmax.f32 %v1616, %v1674
      %v1797 = vmax.f32 %v1617, %v1677
      %v1798 = vmax.f32 %v1618, %v1679
      %v1799 = vmax.f32 %v1619, %v1682
      %v1800 = vmax.f32 %v1620, %v1684
      %v1801 = vmax.f32 %v1621, %v1687
      %v1802 = vmax.f32 %v1622, %v1689
      %v1803 = vmax.f32 %v1623, %v1692
      %v1804 = vmax.f32 %v1624, %v1694
      %v1805 = vmax.f32 %v1625, %v1697
      %v1806 = vmax.f32 %v1626, %v1699
      %v1807 = vmax.f32 %v1627, %v1702
      %v1808 = vmax.f32 %v1628, %v1704
      %v1809 = vmax.f32 %v1629, %v1707
      %v1810 = vmax.f32 %v1630, %v1709
      %v1811 = vmax.f32 %v1631, %v1712
      %v1812 = vmax.f32 %v1632, %v1714
      %v1813 = vmax.f32 %v1633, %v1717
      %v1814 = vmax.f32 %v1634, %v1719
      %v1815 = vmax.f32 %v1635, %v1722
      %v1816 = vmax.f32 %v1636, %v1724
      %v1817 = vmax.f32 %v1637, %v1727
      %v1818 = vmax.f32 %v1638, %v1729
      %v1819 = vmax.f32 %v1639, %v1732
      %v1820 = vmax.f32 %v1640, %v1734
      %v1821 = vmax.f32 %v1641, %v1737
      %v1822 = vmax.f32 %v1642, %v1739
      %v1823 = vmax.f32 %v1643, %v1742
      %v1824 = vmax.f32 %v1644, %v1744
      %v1825 = vrot.slane %v1345, 3
      %v1826 = vrot.slane %v1346, 3
      %v1827 = vsel %vm790, %v1825, %v1826
      %v1828 = vrot.slane %v1347, 3
      %v1829 = vsel %vm790, %v1826, %v1828
      %v1830 = vrot.slane %v1348, 3
      %v1831 = vrot.slane %v1349, 3
      %v1832 = vsel %vm790, %v1830, %v1831
      %v1833 = vrot.slane %v1350, 3
      %v1834 = vsel %vm790, %v1831, %v1833
      %v1835 = vrot.slane %v1351, 3
      %v1836 = vrot.slane %v1352, 3
      %v1837 = vsel %vm790, %v1835, %v1836
      %v1838 = vrot.slane %v1353, 3
      %v1839 = vsel %vm790, %v1836, %v1838
      %v1840 = vrot.slane %v1354, 3
      %v1841 = vrot.slane %v1355, 3
      %v1842 = vsel %vm790, %v1840, %v1841
      %v1843 = vrot.slane %v1356, 3
      %v1844 = vsel %vm790, %v1841, %v1843
      %v1845 = vrot.slane %v1357, 3
      %v1846 = vrot.slane %v1358, 3
      %v1847 = vsel %vm790, %v1845, %v1846
      %v1848 = vrot.slane %v1359, 3
      %v1849 = vsel %vm790, %v1846, %v1848
      %v1850 = vrot.slane %v1360, 3
      %v1851 = vrot.slane %v1361, 3
      %v1852 = vsel %vm790, %v1850, %v1851
      %v1853 = vrot.slane %v1362, 3
      %v1854 = vsel %vm790, %v1851, %v1853
      %v1855 = vrot.slane %v1363, 3
      %v1856 = vrot.slane %v1364, 3
      %v1857 = vsel %vm790, %v1855, %v1856
      %v1858 = vrot.slane %v1365, 3
      %v1859 = vsel %vm790, %v1856, %v1858
      %v1860 = vrot.slane %v1366, 3
      %v1861 = vrot.slane %v1367, 3
      %v1862 = vsel %vm790, %v1860, %v1861
      %v1863 = vrot.slane %v1368, 3
      %v1864 = vsel %vm790, %v1861, %v1863
      %v1865 = vrot.slane %v1369, 3
      %v1866 = vrot.slane %v1370, 3
      %v1867 = vsel %vm790, %v1865, %v1866
      %v1868 = vrot.slane %v1371, 3
      %v1869 = vsel %vm790, %v1866, %v1868
      %v1870 = vrot.slane %v1372, 3
      %v1871 = vrot.slane %v1373, 3
      %v1872 = vsel %vm790, %v1870, %v1871
      %v1873 = vrot.slane %v1374, 3
      %v1874 = vsel %vm790, %v1871, %v1873
      %v1875 = vrot.slane %v1375, 3
      %v1876 = vrot.slane %v1376, 3
      %v1877 = vsel %vm790, %v1875, %v1876
      %v1878 = vrot.slane %v1377, 3
      %v1879 = vsel %vm790, %v1876, %v1878
      %v1880 = vrot.slane %v1378, 3
      %v1881 = vrot.slane %v1379, 3
      %v1882 = vsel %vm790, %v1880, %v1881
      %v1883 = vrot.slane %v1380, 3
      %v1884 = vsel %vm790, %v1881, %v1883
      %v1885 = vrot.slane %v1381, 3
      %v1886 = vrot.slane %v1382, 3
      %v1887 = vsel %vm790, %v1885, %v1886
      %v1888 = vrot.slane %v1383, 3
      %v1889 = vsel %vm790, %v1886, %v1888
      %v1890 = vrot.slane %v1384, 3
      %v1891 = vrot.slane %v1385, 3
      %v1892 = vsel %vm790, %v1890, %v1891
      %v1893 = vrot.slane %v1386, 3
      %v1894 = vsel %vm790, %v1891, %v1893
      %v1895 = vrot.slane %v1387, 3
      %v1896 = vrot.slane %v1388, 3
      %v1897 = vsel %vm790, %v1895, %v1896
      %v1898 = vrot.slane %v1389, 3
      %v1899 = vsel %vm790, %v1896, %v1898
      %v1900 = vrot.slane %v1390, 3
      %v1901 = vrot.slane %v1391, 3
      %v1902 = vsel %vm790, %v1900, %v1901
      %v1903 = vrot.slane %v1392, 3
      %v1904 = vsel %vm790, %v1901, %v1903
      %v1905 = vrot.slane %v1393, 3
      %v1906 = vrot.slane %v1394, 3
      %v1907 = vsel %vm790, %v1905, %v1906
      %v1908 = vrot.slane %v1395, 3
      %v1909 = vsel %vm790, %v1906, %v1908
      %v1910 = vrot.slane %v1396, 3
      %v1911 = vrot.slane %v1397, 3
      %v1912 = vsel %vm790, %v1910, %v1911
      %v1913 = vrot.slane %v1398, 3
      %v1914 = vsel %vm790, %v1911, %v1913
      %v1915 = vrot.slane %v1399, 3
      %v1916 = vrot.slane %v1400, 3
      %v1917 = vsel %vm790, %v1915, %v1916
      %v1918 = vrot.slane %v1401, 3
      %v1919 = vsel %vm790, %v1916, %v1918
      %v1920 = vrot.slane %v1402, 3
      %v1921 = vrot.slane %v1403, 3
      %v1922 = vsel %vm790, %v1920, %v1921
      %v1923 = vrot.slane %v1404, 3
      %v1924 = vsel %vm790, %v1921, %v1923
      %v1965 = vmax.f32 %v1785, %v1827
      %v1966 = vmax.f32 %v1786, %v1829
      %v1967 = vmax.f32 %v1787, %v1832
      %v1968 = vmax.f32 %v1788, %v1834
      %v1969 = vmax.f32 %v1789, %v1837
      %v1970 = vmax.f32 %v1790, %v1839
      %v1971 = vmax.f32 %v1791, %v1842
      %v1972 = vmax.f32 %v1792, %v1844
      %v1973 = vmax.f32 %v1793, %v1847
      %v1974 = vmax.f32 %v1794, %v1849
      %v1975 = vmax.f32 %v1795, %v1852
      %v1976 = vmax.f32 %v1796, %v1854
      %v1977 = vmax.f32 %v1797, %v1857
      %v1978 = vmax.f32 %v1798, %v1859
      %v1979 = vmax.f32 %v1799, %v1862
      %v1980 = vmax.f32 %v1800, %v1864
      %v1981 = vmax.f32 %v1801, %v1867
      %v1982 = vmax.f32 %v1802, %v1869
      %v1983 = vmax.f32 %v1803, %v1872
      %v1984 = vmax.f32 %v1804, %v1874
      %v1985 = vmax.f32 %v1805, %v1877
      %v1986 = vmax.f32 %v1806, %v1879
      %v1987 = vmax.f32 %v1807, %v1882
      %v1988 = vmax.f32 %v1808, %v1884
      %v1989 = vmax.f32 %v1809, %v1887
      %v1990 = vmax.f32 %v1810, %v1889
      %v1991 = vmax.f32 %v1811, %v1892
      %v1992 = vmax.f32 %v1812, %v1894
      %v1993 = vmax.f32 %v1813, %v1897
      %v1994 = vmax.f32 %v1814, %v1899
      %v1995 = vmax.f32 %v1815, %v1902
      %v1996 = vmax.f32 %v1816, %v1904
      %v1997 = vmax.f32 %v1817, %v1907
      %v1998 = vmax.f32 %v1818, %v1909
      %v1999 = vmax.f32 %v1819, %v1912
      %v2000 = vmax.f32 %v1820, %v1914
      %v2001 = vmax.f32 %v1821, %v1917
      %v2002 = vmax.f32 %v1822, %v1919
      %v2003 = vmax.f32 %v1823, %v1922
      %v2004 = vmax.f32 %v1824, %v1924
      %v2005 = vrot.slane %v1345, 4
      %v2006 = vrot.slane %v1346, 4
      %v2007 = vsel %vm971, %v2005, %v2006
      %v2008 = vrot.slane %v1347, 4
      %v2009 = vsel %vm971, %v2006, %v2008
      %v2010 = vrot.slane %v1348, 4
      %v2011 = vrot.slane %v1349, 4
      %v2012 = vsel %vm971, %v2010, %v2011
      %v2013 = vrot.slane %v1350, 4
      %v2014 = vsel %vm971, %v2011, %v2013
      %v2015 = vrot.slane %v1351, 4
      %v2016 = vrot.slane %v1352, 4
      %v2017 = vsel %vm971, %v2015, %v2016
      %v2018 = vrot.slane %v1353, 4
      %v2019 = vsel %vm971, %v2016, %v2018
      %v2020 = vrot.slane %v1354, 4
      %v2021 = vrot.slane %v1355, 4
      %v2022 = vsel %vm971, %v2020, %v2021
      %v2023 = vrot.slane %v1356, 4
      %v2024 = vsel %vm971, %v2021, %v2023
      %v2025 = vrot.slane %v1357, 4
      %v2026 = vrot.slane %v1358, 4
      %v2027 = vsel %vm971, %v2025, %v2026
      %v2028 = vrot.slane %v1359, 4
      %v2029 = vsel %vm971, %v2026, %v2028
      %v2030 = vrot.slane %v1360, 4
      %v2031 = vrot.slane %v1361, 4
      %v2032 = vsel %vm971, %v2030, %v2031
      %v2033 = vrot.slane %v1362, 4
      %v2034 = vsel %vm971, %v2031, %v2033
      %v2035 = vrot.slane %v1363, 4
      %v2036 = vrot.slane %v1364, 4
      %v2037 = vsel %vm971, %v2035, %v2036
      %v2038 = vrot.slane %v1365, 4
      %v2039 = vsel %vm971, %v2036, %v2038
      %v2040 = vrot.slane %v1366, 4
      %v2041 = vrot.slane %v1367, 4
      %v2042 = vsel %vm971, %v2040, %v2041
      %v2043 = vrot.slane %v1368, 4
      %v2044 = vsel %vm971, %v2041, %v2043
      %v2045 = vrot.slane %v1369, 4
      %v2046 = vrot.slane %v1370, 4
      %v2047 = vsel %vm971, %v2045, %v2046
      %v2048 = vrot.slane %v1371, 4
      %v2049 = vsel %vm971, %v2046, %v2048
      %v2050 = vrot.slane %v1372, 4
      %v2051 = vrot.slane %v1373, 4
      %v2052 = vsel %vm971, %v2050, %v2051
      %v2053 = vrot.slane %v1374, 4
      %v2054 = vsel %vm971, %v2051, %v2053
      %v2055 = vrot.slane %v1375, 4
      %v2056 = vrot.slane %v1376, 4
      %v2057 = vsel %vm971, %v2055, %v2056
      %v2058 = vrot.slane %v1377, 4
      %v2059 = vsel %vm971, %v2056, %v2058
      %v2060 = vrot.slane %v1378, 4
      %v2061 = vrot.slane %v1379, 4
      %v2062 = vsel %vm971, %v2060, %v2061
      %v2063 = vrot.slane %v1380, 4
      %v2064 = vsel %vm971, %v2061, %v2063
      %v2065 = vrot.slane %v1381, 4
      %v2066 = vrot.slane %v1382, 4
      %v2067 = vsel %vm971, %v2065, %v2066
      %v2068 = vrot.slane %v1383, 4
      %v2069 = vsel %vm971, %v2066, %v2068
      %v2070 = vrot.slane %v1384, 4
      %v2071 = vrot.slane %v1385, 4
      %v2072 = vsel %vm971, %v2070, %v2071
      %v2073 = vrot.slane %v1386, 4
      %v2074 = vsel %vm971, %v2071, %v2073
      %v2075 = vrot.slane %v1387, 4
      %v2076 = vrot.slane %v1388, 4
      %v2077 = vsel %vm971, %v2075, %v2076
      %v2078 = vrot.slane %v1389, 4
      %v2079 = vsel %vm971, %v2076, %v2078
      %v2080 = vrot.slane %v1390, 4
      %v2081 = vrot.slane %v1391, 4
      %v2082 = vsel %vm971, %v2080, %v2081
      %v2083 = vrot.slane %v1392, 4
      %v2084 = vsel %vm971, %v2081, %v2083
      %v2085 = vrot.slane %v1393, 4
      %v2086 = vrot.slane %v1394, 4
      %v2087 = vsel %vm971, %v2085, %v2086
      %v2088 = vrot.slane %v1395, 4
      %v2089 = vsel %vm971, %v2086, %v2088
      %v2090 = vrot.slane %v1396, 4
      %v2091 = vrot.slane %v1397, 4
      %v2092 = vsel %vm971, %v2090, %v2091
      %v2093 = vrot.slane %v1398, 4
      %v2094 = vsel %vm971, %v2091, %v2093
      %v2095 = vrot.slane %v1399, 4
      %v2096 = vrot.slane %v1400, 4
      %v2097 = vsel %vm971, %v2095, %v2096
      %v2098 = vrot.slane %v1401, 4
      %v2099 = vsel %vm971, %v2096, %v2098
      %v2100 = vrot.slane %v1402, 4
      %v2101 = vrot.slane %v1403, 4
      %v2102 = vsel %vm971, %v2100, %v2101
      %v2103 = vrot.slane %v1404, 4
      %v2104 = vsel %vm971, %v2101, %v2103
      %v2145 = vmax.f32 %v1965, %v2007
      %v2146 = vmax.f32 %v1966, %v2009
      %v2147 = vmax.f32 %v1967, %v2012
      %v2148 = vmax.f32 %v1968, %v2014
      %v2149 = vmax.f32 %v1969, %v2017
      %v2150 = vmax.f32 %v1970, %v2019
      %v2151 = vmax.f32 %v1971, %v2022
      %v2152 = vmax.f32 %v1972, %v2024
      %v2153 = vmax.f32 %v1973, %v2027
      %v2154 = vmax.f32 %v1974, %v2029
      %v2155 = vmax.f32 %v1975, %v2032
      %v2156 = vmax.f32 %v1976, %v2034
      %v2157 = vmax.f32 %v1977, %v2037
      %v2158 = vmax.f32 %v1978, %v2039
      %v2159 = vmax.f32 %v1979, %v2042
      %v2160 = vmax.f32 %v1980, %v2044
      %v2161 = vmax.f32 %v1981, %v2047
      %v2162 = vmax.f32 %v1982, %v2049
      %v2163 = vmax.f32 %v1983, %v2052
      %v2164 = vmax.f32 %v1984, %v2054
      %v2165 = vmax.f32 %v1985, %v2057
      %v2166 = vmax.f32 %v1986, %v2059
      %v2167 = vmax.f32 %v1987, %v2062
      %v2168 = vmax.f32 %v1988, %v2064
      %v2169 = vmax.f32 %v1989, %v2067
      %v2170 = vmax.f32 %v1990, %v2069
      %v2171 = vmax.f32 %v1991, %v2072
      %v2172 = vmax.f32 %v1992, %v2074
      %v2173 = vmax.f32 %v1993, %v2077
      %v2174 = vmax.f32 %v1994, %v2079
      %v2175 = vmax.f32 %v1995, %v2082
      %v2176 = vmax.f32 %v1996, %v2084
      %v2177 = vmax.f32 %v1997, %v2087
      %v2178 = vmax.f32 %v1998, %v2089
      %v2179 = vmax.f32 %v1999, %v2092
      %v2180 = vmax.f32 %v2000, %v2094
      %v2181 = vmax.f32 %v2001, %v2097
      %v2182 = vmax.f32 %v2002, %v2099
      %v2183 = vmax.f32 %v2003, %v2102
      %v2184 = vmax.f32 %v2004, %v2104
      %v2185 = vmax.f32 %v2145, %v2147
      %v2186 = vmax.f32 %v2146, %v2148
      %v2187 = vmax.f32 %v2147, %v2149
      %v2188 = vmax.f32 %v2148, %v2150
      %v2189 = vmax.f32 %v2149, %v2151
      %v2190 = vmax.f32 %v2150, %v2152
      %v2191 = vmax.f32 %v2151, %v2153
      %v2192 = vmax.f32 %v2152, %v2154
      %v2193 = vmax.f32 %v2153, %v2155
      %v2194 = vmax.f32 %v2154, %v2156
      %v2195 = vmax.f32 %v2155, %v2157
      %v2196 = vmax.f32 %v2156, %v2158
      %v2197 = vmax.f32 %v2157, %v2159
      %v2198 = vmax.f32 %v2158, %v2160
      %v2199 = vmax.f32 %v2159, %v2161
      %v2200 = vmax.f32 %v2160, %v2162
      %v2201 = vmax.f32 %v2161, %v2163
      %v2202 = vmax.f32 %v2162, %v2164
      %v2203 = vmax.f32 %v2163, %v2165
      %v2204 = vmax.f32 %v2164, %v2166
      %v2205 = vmax.f32 %v2165, %v2167
      %v2206 = vmax.f32 %v2166, %v2168
      %v2207 = vmax.f32 %v2167, %v2169
      %v2208 = vmax.f32 %v2168, %v2170
      %v2209 = vmax.f32 %v2169, %v2171
      %v2210 = vmax.f32 %v2170, %v2172
      %v2211 = vmax.f32 %v2171, %v2173
      %v2212 = vmax.f32 %v2172, %v2174
      %v2213 = vmax.f32 %v2173, %v2175
      %v2214 = vmax.f32 %v2174, %v2176
      %v2215 = vmax.f32 %v2175, %v2177
      %v2216 = vmax.f32 %v2176, %v2178
      %v2217 = vmax.f32 %v2185, %v2149
      %v2218 = vmax.f32 %v2186, %v2150
      %v2219 = vmax.f32 %v2187, %v2151
      %v2220 = vmax.f32 %v2188, %v2152
      %v2221 = vmax.f32 %v2189, %v2153
      %v2222 = vmax.f32 %v2190, %v2154
      %v2223 = vmax.f32 %v2191, %v2155
      %v2224 = vmax.f32 %v2192, %v2156
      %v2225 = vmax.f32 %v2193, %v2157
      %v2226 = vmax.f32 %v2194, %v2158
      %v2227 = vmax.f32 %v2195, %v2159
      %v2228 = vmax.f32 %v2196, %v2160
      %v2229 = vmax.f32 %v2197, %v2161
      %v2230 = vmax.f32 %v2198, %v2162
      %v2231 = vmax.f32 %v2199, %v2163
      %v2232 = vmax.f32 %v2200, %v2164
      %v2233 = vmax.f32 %v2201, %v2165
      %v2234 = vmax.f32 %v2202, %v2166
      %v2235 = vmax.f32 %v2203, %v2167
      %v2236 = vmax.f32 %v2204, %v2168
      %v2237 = vmax.f32 %v2205, %v2169
      %v2238 = vmax.f32 %v2206, %v2170
      %v2239 = vmax.f32 %v2207, %v2171
      %v2240 = vmax.f32 %v2208, %v2172
      %v2241 = vmax.f32 %v2209, %v2173
      %v2242 = vmax.f32 %v2210, %v2174
      %v2243 = vmax.f32 %v2211, %v2175
      %v2244 = vmax.f32 %v2212, %v2176
      %v2245 = vmax.f32 %v2213, %v2177
      %v2246 = vmax.f32 %v2214, %v2178
      %v2247 = vmax.f32 %v2215, %v2179
      %v2248 = vmax.f32 %v2216, %v2180
      %v2249 = vmax.f32 %v2217, %v2151
      %v2250 = vmax.f32 %v2218, %v2152
      %v2251 = vmax.f32 %v2219, %v2153
      %v2252 = vmax.f32 %v2220, %v2154
      %v2253 = vmax.f32 %v2221, %v2155
      %v2254 = vmax.f32 %v2222, %v2156
      %v2255 = vmax.f32 %v2223, %v2157
      %v2256 = vmax.f32 %v2224, %v2158
      %v2257 = vmax.f32 %v2225, %v2159
      %v2258 = vmax.f32 %v2226, %v2160
      %v2259 = vmax.f32 %v2227, %v2161
      %v2260 = vmax.f32 %v2228, %v2162
      %v2261 = vmax.f32 %v2229, %v2163
      %v2262 = vmax.f32 %v2230, %v2164
      %v2263 = vmax.f32 %v2231, %v2165
      %v2264 = vmax.f32 %v2232, %v2166
      %v2265 = vmax.f32 %v2233, %v2167
      %v2266 = vmax.f32 %v2234, %v2168
      %v2267 = vmax.f32 %v2235, %v2169
      %v2268 = vmax.f32 %v2236, %v2170
      %v2269 = vmax.f32 %v2237, %v2171
      %v2270 = vmax.f32 %v2238, %v2172
      %v2271 = vmax.f32 %v2239, %v2173
      %v2272 = vmax.f32 %v2240, %v2174
      %v2273 = vmax.f32 %v2241, %v2175
      %v2274 = vmax.f32 %v2242, %v2176
      %v2275 = vmax.f32 %v2243, %v2177
      %v2276 = vmax.f32 %v2244, %v2178
      %v2277 = vmax.f32 %v2245, %v2179
      %v2278 = vmax.f32 %v2246, %v2180
      %v2279 = vmax.f32 %v2247, %v2181
      %v2280 = vmax.f32 %v2248, %v2182
      %v2281 = vmax.f32 %v2249, %v2153
      %v2282 = vmax.f32 %v2250, %v2154
      %v2283 = vmax.f32 %v2251, %v2155
      %v2284 = vmax.f32 %v2252, %v2156
      %v2285 = vmax.f32 %v2253, %v2157
      %v2286 = vmax.f32 %v2254, %v2158
      %v2287 = vmax.f32 %v2255, %v2159
      %v2288 = vmax.f32 %v2256, %v2160
      %v2289 = vmax.f32 %v2257, %v2161
      %v2290 = vmax.f32 %v2258, %v2162
      %v2291 = vmax.f32 %v2259, %v2163
      %v2292 = vmax.f32 %v2260, %v2164
      %v2293 = vmax.f32 %v2261, %v2165
      %v2294 = vmax.f32 %v2262, %v2166
      %v2295 = vmax.f32 %v2263, %v2167
      %v2296 = vmax.f32 %v2264, %v2168
      %v2297 = vmax.f32 %v2265, %v2169
      %v2298 = vmax.f32 %v2266, %v2170
      %v2299 = vmax.f32 %v2267, %v2171
      %v2300 = vmax.f32 %v2268, %v2172
      %v2301 = vmax.f32 %v2269, %v2173
      %v2302 = vmax.f32 %v2270, %v2174
      %v2303 = vmax.f32 %v2271, %v2175
      %v2304 = vmax.f32 %v2272, %v2176
      %v2305 = vmax.f32 %v2273, %v2177
      %v2306 = vmax.f32 %v2274, %v2178
      %v2307 = vmax.f32 %v2275, %v2179
      %v2308 = vmax.f32 %v2276, %v2180
      %v2309 = vmax.f32 %v2277, %v2181
      %v2310 = vmax.f32 %v2278, %v2182
      %v2311 = vmax.f32 %v2279, %v2183
      %v2312 = vmax.f32 %v2280, %v2184
      %s2313 = scalar_lea.vmem %s147, 256
      %2314 = vst.msk [vmem:[%s2313] sm:$0xff] %vm181, %v2281
      %2315 = vst.msk [vmem:[%s2313 + $0x8] sm:$0xff] %vm181, %v2282
      %2316 = vst.msk [vmem:[%s2313 + $0x10] sm:$0xff] %vm181, %v2283
      %2317 = vst.msk [vmem:[%s2313 + $0x18] sm:$0xff] %vm181, %v2284
      %2318 = vst.msk [vmem:[%s2313 + $0x20] sm:$0xff] %vm181, %v2285
      %2319 = vst.msk [vmem:[%s2313 + $0x28] sm:$0xff] %vm181, %v2286
      %2320 = vst.msk [vmem:[%s2313 + $0x30] sm:$0xff] %vm181, %v2287
      %2321 = vst.msk [vmem:[%s2313 + $0x38] sm:$0xff] %vm181, %v2288
      %2322 = vst.msk [vmem:[%s2313 + $0x40] sm:$0xff] %vm181, %v2289
      %2323 = vst.msk [vmem:[%s2313 + $0x48] sm:$0xff] %vm181, %v2290
      %2324 = vst.msk [vmem:[%s2313 + $0x50] sm:$0xff] %vm181, %v2291
      %2325 = vst.msk [vmem:[%s2313 + $0x58] sm:$0xff] %vm181, %v2292
      %2326 = vst.msk [vmem:[%s2313 + $0x60] sm:$0xff] %vm181, %v2293
      %2327 = vst.msk [vmem:[%s2313 + $0x68] sm:$0xff] %vm181, %v2294
      %2328 = vst.msk [vmem:[%s2313 + $0x70] sm:$0xff] %vm181, %v2295
      %2329 = vst.msk [vmem:[%s2313 + $0x78] sm:$0xff] %vm181, %v2296
      %2330 = vst.msk [vmem:[%s2313 + $0x80] sm:$0xff] %vm181, %v2297
      %2331 = vst.msk [vmem:[%s2313 + $0x88] sm:$0xff] %vm181, %v2298
      %2332 = vst.msk [vmem:[%s2313 + $0x90] sm:$0xff] %vm181, %v2299
      %2333 = vst.msk [vmem:[%s2313 + $0x98] sm:$0xff] %vm181, %v2300
      %2334 = vst.msk [vmem:[%s2313 + $0xa0] sm:$0xff] %vm181, %v2301
      %2335 = vst.msk [vmem:[%s2313 + $0xa8] sm:$0xff] %vm181, %v2302
      %2336 = vst.msk [vmem:[%s2313 + $0xb0] sm:$0xff] %vm181, %v2303
      %2337 = vst.msk [vmem:[%s2313 + $0xb8] sm:$0xff] %vm181, %v2304
      %2338 = vst.msk [vmem:[%s2313 + $0xc0] sm:$0xff] %vm181, %v2305
      %2339 = vst.msk [vmem:[%s2313 + $0xc8] sm:$0xff] %vm181, %v2306
      %2340 = vst.msk [vmem:[%s2313 + $0xd0] sm:$0xff] %vm181, %v2307
      %2341 = vst.msk [vmem:[%s2313 + $0xd8] sm:$0xff] %vm181, %v2308
      %2342 = vst.msk [vmem:[%s2313 + $0xe0] sm:$0xff] %vm181, %v2309
      %2343 = vst.msk [vmem:[%s2313 + $0xe8] sm:$0xff] %vm181, %v2310
      %2344 = vst.msk [vmem:[%s2313 + $0xf0] sm:$0xff] %vm181, %v2311
      %2345 = vst.msk [vmem:[%s2313 + $0xf8] sm:$0xff] %vm181, %v2312
      %2346 = vst.msk [vmem:[%s275 + $0x2] sm:$0xff] %vm181, %v2281
      %2347 = vst.msk [vmem:[%s275 + $0xa] sm:$0xff] %vm181, %v2282
      %2348 = vst.msk [vmem:[%s275 + $0x1a] sm:$0xff] %vm181, %v2283
      %2349 = vst.msk [vmem:[%s275 + $0x22] sm:$0xff] %vm181, %v2284
      %2350 = vst.msk [vmem:[%s275 + $0x32] sm:$0xff] %vm181, %v2285
      %2351 = vst.msk [vmem:[%s275 + $0x3a] sm:$0xff] %vm181, %v2286
      %2352 = vst.msk [vmem:[%s275 + $0x4a] sm:$0xff] %vm181, %v2287
      %2353 = vst.msk [vmem:[%s275 + $0x52] sm:$0xff] %vm181, %v2288
      %2354 = vst.msk [vmem:[%s275 + $0x62] sm:$0xff] %vm181, %v2289
      %2355 = vst.msk [vmem:[%s275 + $0x6a] sm:$0xff] %vm181, %v2290
      %2356 = vst.msk [vmem:[%s275 + $0x7a] sm:$0xff] %vm181, %v2291
      %2357 = vst.msk [vmem:[%s275 + $0x82] sm:$0xff] %vm181, %v2292
      %2358 = vst.msk [vmem:[%s275 + $0x92] sm:$0xff] %vm181, %v2293
      %2359 = vst.msk [vmem:[%s275 + $0x9a] sm:$0xff] %vm181, %v2294
      %2360 = vst.msk [vmem:[%s275 + $0xaa] sm:$0xff] %vm181, %v2295
      %2361 = vst.msk [vmem:[%s275 + $0xb2] sm:$0xff] %vm181, %v2296
      %2362 = vst.msk [vmem:[%s275 + $0xc2] sm:$0xff] %vm181, %v2297
      %2363 = vst.msk [vmem:[%s275 + $0xca] sm:$0xff] %vm181, %v2298
      %2364 = vst.msk [vmem:[%s275 + $0xda] sm:$0xff] %vm181, %v2299
      %2365 = vst.msk [vmem:[%s275 + $0xe2] sm:$0xff] %vm181, %v2300
      %2366 = vst.msk [vmem:[%s275 + $0xf2] sm:$0xff] %vm181, %v2301
      %2367 = vst.msk [vmem:[%s275 + $0xfa] sm:$0xff] %vm181, %v2302
      %2368 = vst.msk [vmem:[%s275 + $0x10a] sm:$0xff] %vm181, %v2303
      %2369 = vst.msk [vmem:[%s275 + $0x112] sm:$0xff] %vm181, %v2304
      %2370 = vst.msk [vmem:[%s275 + $0x122] sm:$0xff] %vm181, %v2305
      %2371 = vst.msk [vmem:[%s275 + $0x12a] sm:$0xff] %vm181, %v2306
      %2372 = vst.msk [vmem:[%s275 + $0x13a] sm:$0xff] %vm181, %v2307
      %2373 = vst.msk [vmem:[%s275 + $0x142] sm:$0xff] %vm181, %v2308
      %2374 = vst.msk [vmem:[%s275 + $0x152] sm:$0xff] %vm181, %v2309
      %2375 = vst.msk [vmem:[%s275 + $0x15a] sm:$0xff] %vm181, %v2310
      %2376 = vst.msk [vmem:[%s275 + $0x16a] sm:$0xff] %vm181, %v2311
      %2377 = vst.msk [vmem:[%s275 + $0x172] sm:$0xff] %vm181, %v2312
      %v2378 = vld [vmem:[#allocation2] sm:$0xff]
      %v2379 = vld [vmem:[#allocation2 + $0x8] sm:$0xff]
      %v2380 = vld [vmem:[#allocation2 + $0x10] sm:$0xf]
      %v2381 = vld [vmem:[#allocation2 + $0x18] sm:$0xff]
      %v2382 = vld [vmem:[#allocation2 + $0x20] sm:$0xff]
      %v2383 = vld [vmem:[#allocation2 + $0x28] sm:$0xf]
      %v2384 = vld [vmem:[#allocation2 + $0x30] sm:$0xff]
      %v2385 = vld [vmem:[#allocation2 + $0x38] sm:$0xff]
      %v2386 = vld [vmem:[#allocation2 + $0x40] sm:$0xf]
      %v2387 = vld [vmem:[#allocation2 + $0x48] sm:$0xff]
      %v2388 = vld [vmem:[#allocation2 + $0x50] sm:$0xff]
      %v2389 = vld [vmem:[#allocation2 + $0x58] sm:$0xf]
      %v2390 = vld [vmem:[#allocation2 + $0x60] sm:$0xff]
      %v2391 = vld [vmem:[#allocation2 + $0x68] sm:$0xff]
      %v2392 = vld [vmem:[#allocation2 + $0x70] sm:$0xf]
      %v2393 = vld [vmem:[#allocation2 + $0x78] sm:$0xff]
      %v2394 = vld [vmem:[#allocation2 + $0x80] sm:$0xff]
      %v2395 = vld [vmem:[#allocation2 + $0x88] sm:$0xf]
      %v2396 = vld [vmem:[#allocation2 + $0x90] sm:$0xff]
      %v2397 = vld [vmem:[#allocation2 + $0x98] sm:$0xff]
      %v2398 = vld [vmem:[#allocation2 + $0xa0] sm:$0xf]
      %v2399 = vld [vmem:[#allocation2 + $0xa8] sm:$0xff]
      %v2400 = vld [vmem:[#allocation2 + $0xb0] sm:$0xff]
      %v2401 = vld [vmem:[#allocation2 + $0xb8] sm:$0xf]
      %v2402 = vld [vmem:[#allocation2 + $0xc0] sm:$0xff]
      %v2403 = vld [vmem:[#allocation2 + $0xc8] sm:$0xff]
      %v2404 = vld [vmem:[#allocation2 + $0xd0] sm:$0xf]
      %v2405 = vld [vmem:[#allocation2 + $0xd8] sm:$0xff]
      %v2406 = vld [vmem:[#allocation2 + $0xe0] sm:$0xff]
      %v2407 = vld [vmem:[#allocation2 + $0xe8] sm:$0xf]
      %v2408 = vld [vmem:[#allocation2 + $0xf0] sm:$0xff]
      %v2409 = vld [vmem:[#allocation2 + $0xf8] sm:$0xff]
      %v2410 = vld [vmem:[#allocation2 + $0x100] sm:$0xf]
      %v2411 = vld [vmem:[#allocation2 + $0x108] sm:$0xff]
      %v2412 = vld [vmem:[#allocation2 + $0x110] sm:$0xff]
      %v2413 = vld [vmem:[#allocation2 + $0x118] sm:$0xf]
      %v2414 = vld [vmem:[#allocation2 + $0x120] sm:$0xff]
      %v2415 = vld [vmem:[#allocation2 + $0x128] sm:$0xff]
      %v2416 = vld [vmem:[#allocation2 + $0x130] sm:$0xf]
      %v2417 = vld [vmem:[#allocation2 + $0x138] sm:$0xff]
      %v2418 = vld [vmem:[#allocation2 + $0x140] sm:$0xff]
      %v2419 = vld [vmem:[#allocation2 + $0x148] sm:$0xf]
      %v2420 = vld [vmem:[#allocation2 + $0x150] sm:$0xff]
      %v2421 = vld [vmem:[#allocation2 + $0x158] sm:$0xff]
      %v2422 = vld [vmem:[#allocation2 + $0x160] sm:$0xf]
      %v2423 = vld [vmem:[#allocation2 + $0x168] sm:$0xff]
      %v2424 = vld [vmem:[#allocation2 + $0x170] sm:$0xff]
      %v2425 = vld [vmem:[#allocation2 + $0x178] sm:$0xf]
      %v2426 = vld [vmem:[#allocation2 + $0x180] sm:$0xff]
      %v2427 = vld [vmem:[#allocation2 + $0x188] sm:$0xff]
      %v2428 = vld [vmem:[#allocation2 + $0x190] sm:$0xf]
      %v2429 = vld [vmem:[#allocation2 + $0x198] sm:$0xff]
      %v2430 = vld [vmem:[#allocation2 + $0x1a0] sm:$0xff]
      %v2431 = vld [vmem:[#allocation2 + $0x1a8] sm:$0xf]
      %v2432 = vld [vmem:[#allocation2 + $0x1b0] sm:$0xff]
      %v2433 = vld [vmem:[#allocation2 + $0x1b8] sm:$0xff]
      %v2434 = vld [vmem:[#allocation2 + $0x1c0] sm:$0xf]
      %v2435 = vld [vmem:[#allocation2 + $0x1c8] sm:$0xff]
      %v2436 = vld [vmem:[#allocation2 + $0x1d0] sm:$0xff]
      %v2437 = vld [vmem:[#allocation2 + $0x1d8] sm:$0xf]
      %v2498 = vrot.slane %v2378, 1
      %v2499 = vrot.slane %v2379, 1
      %v2500 = vsel %vm428, %v2498, %v2499
      %v2501 = vrot.slane %v2380, 1
      %v2502 = vsel %vm428, %v2499, %v2501
      %v2503 = vrot.slane %v2381, 1
      %v2504 = vrot.slane %v2382, 1
      %v2505 = vsel %vm428, %v2503, %v2504
      %v2506 = vrot.slane %v2383, 1
      %v2507 = vsel %vm428, %v2504, %v2506
      %v2508 = vrot.slane %v2384, 1
      %v2509 = vrot.slane %v2385, 1
      %v2510 = vsel %vm428, %v2508, %v2509
      %v2511 = vrot.slane %v2386, 1
      %v2512 = vsel %vm428, %v2509, %v2511
      %v2513 = vrot.slane %v2387, 1
      %v2514 = vrot.slane %v2388, 1
      %v2515 = vsel %vm428, %v2513, %v2514
      %v2516 = vrot.slane %v2389, 1
      %v2517 = vsel %vm428, %v2514, %v2516
      %v2518 = vrot.slane %v2390, 1
      %v2519 = vrot.slane %v2391, 1
      %v2520 = vsel %vm428, %v2518, %v2519
      %v2521 = vrot.slane %v2392, 1
      %v2522 = vsel %vm428, %v2519, %v2521
      %v2523 = vrot.slane %v2393, 1
      %v2524 = vrot.slane %v2394, 1
      %v2525 = vsel %vm428, %v2523, %v2524
      %v2526 = vrot.slane %v2395, 1
      %v2527 = vsel %vm428, %v2524, %v2526
      %v2528 = vrot.slane %v2396, 1
      %v2529 = vrot.slane %v2397, 1
      %v2530 = vsel %vm428, %v2528, %v2529
      %v2531 = vrot.slane %v2398, 1
      %v2532 = vsel %vm428, %v2529, %v2531
      %v2533 = vrot.slane %v2399, 1
      %v2534 = vrot.slane %v2400, 1
      %v2535 = vsel %vm428, %v2533, %v2534
      %v2536 = vrot.slane %v2401, 1
      %v2537 = vsel %vm428, %v2534, %v2536
      %v2538 = vrot.slane %v2402, 1
      %v2539 = vrot.slane %v2403, 1
      %v2540 = vsel %vm428, %v2538, %v2539
      %v2541 = vrot.slane %v2404, 1
      %v2542 = vsel %vm428, %v2539, %v2541
      %v2543 = vrot.slane %v2405, 1
      %v2544 = vrot.slane %v2406, 1
      %v2545 = vsel %vm428, %v2543, %v2544
      %v2546 = vrot.slane %v2407, 1
      %v2547 = vsel %vm428, %v2544, %v2546
      %v2548 = vrot.slane %v2408, 1
      %v2549 = vrot.slane %v2409, 1
      %v2550 = vsel %vm428, %v2548, %v2549
      %v2551 = vrot.slane %v2410, 1
      %v2552 = vsel %vm428, %v2549, %v2551
      %v2553 = vrot.slane %v2411, 1
      %v2554 = vrot.slane %v2412, 1
      %v2555 = vsel %vm428, %v2553, %v2554
      %v2556 = vrot.slane %v2413, 1
      %v2557 = vsel %vm428, %v2554, %v2556
      %v2558 = vrot.slane %v2414, 1
      %v2559 = vrot.slane %v2415, 1
      %v2560 = vsel %vm428, %v2558, %v2559
      %v2561 = vrot.slane %v2416, 1
      %v2562 = vsel %vm428, %v2559, %v2561
      %v2563 = vrot.slane %v2417, 1
      %v2564 = vrot.slane %v2418, 1
      %v2565 = vsel %vm428, %v2563, %v2564
      %v2566 = vrot.slane %v2419, 1
      %v2567 = vsel %vm428, %v2564, %v2566
      %v2568 = vrot.slane %v2420, 1
      %v2569 = vrot.slane %v2421, 1
      %v2570 = vsel %vm428, %v2568, %v2569
      %v2571 = vrot.slane %v2422, 1
      %v2572 = vsel %vm428, %v2569, %v2571
      %v2573 = vrot.slane %v2423, 1
      %v2574 = vrot.slane %v2424, 1
      %v2575 = vsel %vm428, %v2573, %v2574
      %v2576 = vrot.slane %v2425, 1
      %v2577 = vsel %vm428, %v2574, %v2576
      %v2578 = vrot.slane %v2426, 1
      %v2579 = vrot.slane %v2427, 1
      %v2580 = vsel %vm428, %v2578, %v2579
      %v2581 = vrot.slane %v2428, 1
      %v2582 = vsel %vm428, %v2579, %v2581
      %v2583 = vrot.slane %v2429, 1
      %v2584 = vrot.slane %v2430, 1
      %v2585 = vsel %vm428, %v2583, %v2584
      %v2586 = vrot.slane %v2431, 1
      %v2587 = vsel %vm428, %v2584, %v2586
      %v2588 = vrot.slane %v2432, 1
      %v2589 = vrot.slane %v2433, 1
      %v2590 = vsel %vm428, %v2588, %v2589
      %v2591 = vrot.slane %v2434, 1
      %v2592 = vsel %vm428, %v2589, %v2591
      %v2593 = vrot.slane %v2435, 1
      %v2594 = vrot.slane %v2436, 1
      %v2595 = vsel %vm428, %v2593, %v2594
      %v2596 = vrot.slane %v2437, 1
      %v2597 = vsel %vm428, %v2594, %v2596
      %v2638 = vmax.f32 %v2378, %v2500
      %v2639 = vmax.f32 %v2379, %v2502
      %v2640 = vmax.f32 %v2381, %v2505
      %v2641 = vmax.f32 %v2382, %v2507
      %v2642 = vmax.f32 %v2384, %v2510
      %v2643 = vmax.f32 %v2385, %v2512
      %v2644 = vmax.f32 %v2387, %v2515
      %v2645 = vmax.f32 %v2388, %v2517
      %v2646 = vmax.f32 %v2390, %v2520
      %v2647 = vmax.f32 %v2391, %v2522
      %v2648 = vmax.f32 %v2393, %v2525
      %v2649 = vmax.f32 %v2394, %v2527
      %v2650 = vmax.f32 %v2396, %v2530
      %v2651 = vmax.f32 %v2397, %v2532
      %v2652 = vmax.f32 %v2399, %v2535
      %v2653 = vmax.f32 %v2400, %v2537
      %v2654 = vmax.f32 %v2402, %v2540
      %v2655 = vmax.f32 %v2403, %v2542
      %v2656 = vmax.f32 %v2405, %v2545
      %v2657 = vmax.f32 %v2406, %v2547
      %v2658 = vmax.f32 %v2408, %v2550
      %v2659 = vmax.f32 %v2409, %v2552
      %v2660 = vmax.f32 %v2411, %v2555
      %v2661 = vmax.f32 %v2412, %v2557
      %v2662 = vmax.f32 %v2414, %v2560
      %v2663 = vmax.f32 %v2415, %v2562
      %v2664 = vmax.f32 %v2417, %v2565
      %v2665 = vmax.f32 %v2418, %v2567
      %v2666 = vmax.f32 %v2420, %v2570
      %v2667 = vmax.f32 %v2421, %v2572
      %v2668 = vmax.f32 %v2423, %v2575
      %v2669 = vmax.f32 %v2424, %v2577
      %v2670 = vmax.f32 %v2426, %v2580
      %v2671 = vmax.f32 %v2427, %v2582
      %v2672 = vmax.f32 %v2429, %v2585
      %v2673 = vmax.f32 %v2430, %v2587
      %v2674 = vmax.f32 %v2432, %v2590
      %v2675 = vmax.f32 %v2433, %v2592
      %v2676 = vmax.f32 %v2435, %v2595
      %v2677 = vmax.f32 %v2436, %v2597
      %v2678 = vrot.slane %v2378, 2
      %v2679 = vrot.slane %v2379, 2
      %v2680 = vsel %vm609, %v2678, %v2679
      %v2681 = vrot.slane %v2380, 2
      %v2682 = vsel %vm609, %v2679, %v2681
      %v2683 = vrot.slane %v2381, 2
      %v2684 = vrot.slane %v2382, 2
      %v2685 = vsel %vm609, %v2683, %v2684
      %v2686 = vrot.slane %v2383, 2
      %v2687 = vsel %vm609, %v2684, %v2686
      %v2688 = vrot.slane %v2384, 2
      %v2689 = vrot.slane %v2385, 2
      %v2690 = vsel %vm609, %v2688, %v2689
      %v2691 = vrot.slane %v2386, 2
      %v2692 = vsel %vm609, %v2689, %v2691
      %v2693 = vrot.slane %v2387, 2
      %v2694 = vrot.slane %v2388, 2
      %v2695 = vsel %vm609, %v2693, %v2694
      %v2696 = vrot.slane %v2389, 2
      %v2697 = vsel %vm609, %v2694, %v2696
      %v2698 = vrot.slane %v2390, 2
      %v2699 = vrot.slane %v2391, 2
      %v2700 = vsel %vm609, %v2698, %v2699
      %v2701 = vrot.slane %v2392, 2
      %v2702 = vsel %vm609, %v2699, %v2701
      %v2703 = vrot.slane %v2393, 2
      %v2704 = vrot.slane %v2394, 2
      %v2705 = vsel %vm609, %v2703, %v2704
      %v2706 = vrot.slane %v2395, 2
      %v2707 = vsel %vm609, %v2704, %v2706
      %v2708 = vrot.slane %v2396, 2
      %v2709 = vrot.slane %v2397, 2
      %v2710 = vsel %vm609, %v2708, %v2709
      %v2711 = vrot.slane %v2398, 2
      %v2712 = vsel %vm609, %v2709, %v2711
      %v2713 = vrot.slane %v2399, 2
      %v2714 = vrot.slane %v2400, 2
      %v2715 = vsel %vm609, %v2713, %v2714
      %v2716 = vrot.slane %v2401, 2
      %v2717 = vsel %vm609, %v2714, %v2716
      %v2718 = vrot.slane %v2402, 2
      %v2719 = vrot.slane %v2403, 2
      %v2720 = vsel %vm609, %v2718, %v2719
      %v2721 = vrot.slane %v2404, 2
      %v2722 = vsel %vm609, %v2719, %v2721
      %v2723 = vrot.slane %v2405, 2
      %v2724 = vrot.slane %v2406, 2
      %v2725 = vsel %vm609, %v2723, %v2724
      %v2726 = vrot.slane %v2407, 2
      %v2727 = vsel %vm609, %v2724, %v2726
      %v2728 = vrot.slane %v2408, 2
      %v2729 = vrot.slane %v2409, 2
      %v2730 = vsel %vm609, %v2728, %v2729
      %v2731 = vrot.slane %v2410, 2
      %v2732 = vsel %vm609, %v2729, %v2731
      %v2733 = vrot.slane %v2411, 2
      %v2734 = vrot.slane %v2412, 2
      %v2735 = vsel %vm609, %v2733, %v2734
      %v2736 = vrot.slane %v2413, 2
      %v2737 = vsel %vm609, %v2734, %v2736
      %v2738 = vrot.slane %v2414, 2
      %v2739 = vrot.slane %v2415, 2
      %v2740 = vsel %vm609, %v2738, %v2739
      %v2741 = vrot.slane %v2416, 2
      %v2742 = vsel %vm609, %v2739, %v2741
      %v2743 = vrot.slane %v2417, 2
      %v2744 = vrot.slane %v2418, 2
      %v2745 = vsel %vm609, %v2743, %v2744
      %v2746 = vrot.slane %v2419, 2
      %v2747 = vsel %vm609, %v2744, %v2746
      %v2748 = vrot.slane %v2420, 2
      %v2749 = vrot.slane %v2421, 2
      %v2750 = vsel %vm609, %v2748, %v2749
      %v2751 = vrot.slane %v2422, 2
      %v2752 = vsel %vm609, %v2749, %v2751
      %v2753 = vrot.slane %v2423, 2
      %v2754 = vrot.slane %v2424, 2
      %v2755 = vsel %vm609, %v2753, %v2754
      %v2756 = vrot.slane %v2425, 2
      %v2757 = vsel %vm609, %v2754, %v2756
      %v2758 = vrot.slane %v2426, 2
      %v2759 = vrot.slane %v2427, 2
      %v2760 = vsel %vm609, %v2758, %v2759
      %v2761 = vrot.slane %v2428, 2
      %v2762 = vsel %vm609, %v2759, %v2761
      %v2763 = vrot.slane %v2429, 2
      %v2764 = vrot.slane %v2430, 2
      %v2765 = vsel %vm609, %v2763, %v2764
      %v2766 = vrot.slane %v2431, 2
      %v2767 = vsel %vm609, %v2764, %v2766
      %v2768 = vrot.slane %v2432, 2
      %v2769 = vrot.slane %v2433, 2
      %v2770 = vsel %vm609, %v2768, %v2769
      %v2771 = vrot.slane %v2434, 2
      %v2772 = vsel %vm609, %v2769, %v2771
      %v2773 = vrot.slane %v2435, 2
      %v2774 = vrot.slane %v2436, 2
      %v2775 = vsel %vm609, %v2773, %v2774
      %v2776 = vrot.slane %v2437, 2
      %v2777 = vsel %vm609, %v2774, %v2776
      %v2818 = vmax.f32 %v2638, %v2680
      %v2819 = vmax.f32 %v2639, %v2682
      %v2820 = vmax.f32 %v2640, %v2685
      %v2821 = vmax.f32 %v2641, %v2687
      %v2822 = vmax.f32 %v2642, %v2690
      %v2823 = vmax.f32 %v2643, %v2692
      %v2824 = vmax.f32 %v2644, %v2695
      %v2825 = vmax.f32 %v2645, %v2697
      %v2826 = vmax.f32 %v2646, %v2700
      %v2827 = vmax.f32 %v2647, %v2702
      %v2828 = vmax.f32 %v2648, %v2705
      %v2829 = vmax.f32 %v2649, %v2707
      %v2830 = vmax.f32 %v2650, %v2710
      %v2831 = vmax.f32 %v2651, %v2712
      %v2832 = vmax.f32 %v2652, %v2715
      %v2833 = vmax.f32 %v2653, %v2717
      %v2834 = vmax.f32 %v2654, %v2720
      %v2835 = vmax.f32 %v2655, %v2722
      %v2836 = vmax.f32 %v2656, %v2725
      %v2837 = vmax.f32 %v2657, %v2727
      %v2838 = vmax.f32 %v2658, %v2730
      %v2839 = vmax.f32 %v2659, %v2732
      %v2840 = vmax.f32 %v2660, %v2735
      %v2841 = vmax.f32 %v2661, %v2737
      %v2842 = vmax.f32 %v2662, %v2740
      %v2843 = vmax.f32 %v2663, %v2742
      %v2844 = vmax.f32 %v2664, %v2745
      %v2845 = vmax.f32 %v2665, %v2747
      %v2846 = vmax.f32 %v2666, %v2750
      %v2847 = vmax.f32 %v2667, %v2752
      %v2848 = vmax.f32 %v2668, %v2755
      %v2849 = vmax.f32 %v2669, %v2757
      %v2850 = vmax.f32 %v2670, %v2760
      %v2851 = vmax.f32 %v2671, %v2762
      %v2852 = vmax.f32 %v2672, %v2765
      %v2853 = vmax.f32 %v2673, %v2767
      %v2854 = vmax.f32 %v2674, %v2770
      %v2855 = vmax.f32 %v2675, %v2772
      %v2856 = vmax.f32 %v2676, %v2775
      %v2857 = vmax.f32 %v2677, %v2777
      %v2858 = vrot.slane %v2378, 3
      %v2859 = vrot.slane %v2379, 3
      %v2860 = vsel %vm790, %v2858, %v2859
      %v2861 = vrot.slane %v2380, 3
      %v2862 = vsel %vm790, %v2859, %v2861
      %v2863 = vrot.slane %v2381, 3
      %v2864 = vrot.slane %v2382, 3
      %v2865 = vsel %vm790, %v2863, %v2864
      %v2866 = vrot.slane %v2383, 3
      %v2867 = vsel %vm790, %v2864, %v2866
      %v2868 = vrot.slane %v2384, 3
      %v2869 = vrot.slane %v2385, 3
      %v2870 = vsel %vm790, %v2868, %v2869
      %v2871 = vrot.slane %v2386, 3
      %v2872 = vsel %vm790, %v2869, %v2871
      %v2873 = vrot.slane %v2387, 3
      %v2874 = vrot.slane %v2388, 3
      %v2875 = vsel %vm790, %v2873, %v2874
      %v2876 = vrot.slane %v2389, 3
      %v2877 = vsel %vm790, %v2874, %v2876
      %v2878 = vrot.slane %v2390, 3
      %v2879 = vrot.slane %v2391, 3
      %v2880 = vsel %vm790, %v2878, %v2879
      %v2881 = vrot.slane %v2392, 3
      %v2882 = vsel %vm790, %v2879, %v2881
      %v2883 = vrot.slane %v2393, 3
      %v2884 = vrot.slane %v2394, 3
      %v2885 = vsel %vm790, %v2883, %v2884
      %v2886 = vrot.slane %v2395, 3
      %v2887 = vsel %vm790, %v2884, %v2886
      %v2888 = vrot.slane %v2396, 3
      %v2889 = vrot.slane %v2397, 3
      %v2890 = vsel %vm790, %v2888, %v2889
      %v2891 = vrot.slane %v2398, 3
      %v2892 = vsel %vm790, %v2889, %v2891
      %v2893 = vrot.slane %v2399, 3
      %v2894 = vrot.slane %v2400, 3
      %v2895 = vsel %vm790, %v2893, %v2894
      %v2896 = vrot.slane %v2401, 3
      %v2897 = vsel %vm790, %v2894, %v2896
      %v2898 = vrot.slane %v2402, 3
      %v2899 = vrot.slane %v2403, 3
      %v2900 = vsel %vm790, %v2898, %v2899
      %v2901 = vrot.slane %v2404, 3
      %v2902 = vsel %vm790, %v2899, %v2901
      %v2903 = vrot.slane %v2405, 3
      %v2904 = vrot.slane %v2406, 3
      %v2905 = vsel %vm790, %v2903, %v2904
      %v2906 = vrot.slane %v2407, 3
      %v2907 = vsel %vm790, %v2904, %v2906
      %v2908 = vrot.slane %v2408, 3
      %v2909 = vrot.slane %v2409, 3
      %v2910 = vsel %vm790, %v2908, %v2909
      %v2911 = vrot.slane %v2410, 3
      %v2912 = vsel %vm790, %v2909, %v2911
      %v2913 = vrot.slane %v2411, 3
      %v2914 = vrot.slane %v2412, 3
      %v2915 = vsel %vm790, %v2913, %v2914
      %v2916 = vrot.slane %v2413, 3
      %v2917 = vsel %vm790, %v2914, %v2916
      %v2918 = vrot.slane %v2414, 3
      %v2919 = vrot.slane %v2415, 3
      %v2920 = vsel %vm790, %v2918, %v2919
      %v2921 = vrot.slane %v2416, 3
      %v2922 = vsel %vm790, %v2919, %v2921
      %v2923 = vrot.slane %v2417, 3
      %v2924 = vrot.slane %v2418, 3
      %v2925 = vsel %vm790, %v2923, %v2924
      %v2926 = vrot.slane %v2419, 3
      %v2927 = vsel %vm790, %v2924, %v2926
      %v2928 = vrot.slane %v2420, 3
      %v2929 = vrot.slane %v2421, 3
      %v2930 = vsel %vm790, %v2928, %v2929
      %v2931 = vrot.slane %v2422, 3
      %v2932 = vsel %vm790, %v2929, %v2931
      %v2933 = vrot.slane %v2423, 3
      %v2934 = vrot.slane %v2424, 3
      %v2935 = vsel %vm790, %v2933, %v2934
      %v2936 = vrot.slane %v2425, 3
      %v2937 = vsel %vm790, %v2934, %v2936
      %v2938 = vrot.slane %v2426, 3
      %v2939 = vrot.slane %v2427, 3
      %v2940 = vsel %vm790, %v2938, %v2939
      %v2941 = vrot.slane %v2428, 3
      %v2942 = vsel %vm790, %v2939, %v2941
      %v2943 = vrot.slane %v2429, 3
      %v2944 = vrot.slane %v2430, 3
      %v2945 = vsel %vm790, %v2943, %v2944
      %v2946 = vrot.slane %v2431, 3
      %v2947 = vsel %vm790, %v2944, %v2946
      %v2948 = vrot.slane %v2432, 3
      %v2949 = vrot.slane %v2433, 3
      %v2950 = vsel %vm790, %v2948, %v2949
      %v2951 = vrot.slane %v2434, 3
      %v2952 = vsel %vm790, %v2949, %v2951
      %v2953 = vrot.slane %v2435, 3
      %v2954 = vrot.slane %v2436, 3
      %v2955 = vsel %vm790, %v2953, %v2954
      %v2956 = vrot.slane %v2437, 3
      %v2957 = vsel %vm790, %v2954, %v2956
      %v2998 = vmax.f32 %v2818, %v2860
      %v2999 = vmax.f32 %v2819, %v2862
      %v3000 = vmax.f32 %v2820, %v2865
      %v3001 = vmax.f32 %v2821, %v2867
      %v3002 = vmax.f32 %v2822, %v2870
      %v3003 = vmax.f32 %v2823, %v2872
      %v3004 = vmax.f32 %v2824, %v2875
      %v3005 = vmax.f32 %v2825, %v2877
      %v3006 = vmax.f32 %v2826, %v2880
      %v3007 = vmax.f32 %v2827, %v2882
      %v3008 = vmax.f32 %v2828, %v2885
      %v3009 = vmax.f32 %v2829, %v2887
      %v3010 = vmax.f32 %v2830, %v2890
      %v3011 = vmax.f32 %v2831, %v2892
      %v3012 = vmax.f32 %v2832, %v2895
      %v3013 = vmax.f32 %v2833, %v2897
      %v3014 = vmax.f32 %v2834, %v2900
      %v3015 = vmax.f32 %v2835, %v2902
      %v3016 = vmax.f32 %v2836, %v2905
      %v3017 = vmax.f32 %v2837, %v2907
      %v3018 = vmax.f32 %v2838, %v2910
      %v3019 = vmax.f32 %v2839, %v2912
      %v3020 = vmax.f32 %v2840, %v2915
      %v3021 = vmax.f32 %v2841, %v2917
      %v3022 = vmax.f32 %v2842, %v2920
      %v3023 = vmax.f32 %v2843, %v2922
      %v3024 = vmax.f32 %v2844, %v2925
      %v3025 = vmax.f32 %v2845, %v2927
      %v3026 = vmax.f32 %v2846, %v2930
      %v3027 = vmax.f32 %v2847, %v2932
      %v3028 = vmax.f32 %v2848, %v2935
      %v3029 = vmax.f32 %v2849, %v2937
      %v3030 = vmax.f32 %v2850, %v2940
      %v3031 = vmax.f32 %v2851, %v2942
      %v3032 = vmax.f32 %v2852, %v2945
      %v3033 = vmax.f32 %v2853, %v2947
      %v3034 = vmax.f32 %v2854, %v2950
      %v3035 = vmax.f32 %v2855, %v2952
      %v3036 = vmax.f32 %v2856, %v2955
      %v3037 = vmax.f32 %v2857, %v2957
      %v3038 = vrot.slane %v2378, 4
      %v3039 = vrot.slane %v2379, 4
      %v3040 = vsel %vm971, %v3038, %v3039
      %v3041 = vrot.slane %v2380, 4
      %v3042 = vsel %vm971, %v3039, %v3041
      %v3043 = vrot.slane %v2381, 4
      %v3044 = vrot.slane %v2382, 4
      %v3045 = vsel %vm971, %v3043, %v3044
      %v3046 = vrot.slane %v2383, 4
      %v3047 = vsel %vm971, %v3044, %v3046
      %v3048 = vrot.slane %v2384, 4
      %v3049 = vrot.slane %v2385, 4
      %v3050 = vsel %vm971, %v3048, %v3049
      %v3051 = vrot.slane %v2386, 4
      %v3052 = vsel %vm971, %v3049, %v3051
      %v3053 = vrot.slane %v2387, 4
      %v3054 = vrot.slane %v2388, 4
      %v3055 = vsel %vm971, %v3053, %v3054
      %v3056 = vrot.slane %v2389, 4
      %v3057 = vsel %vm971, %v3054, %v3056
      %v3058 = vrot.slane %v2390, 4
      %v3059 = vrot.slane %v2391, 4
      %v3060 = vsel %vm971, %v3058, %v3059
      %v3061 = vrot.slane %v2392, 4
      %v3062 = vsel %vm971, %v3059, %v3061
      %v3063 = vrot.slane %v2393, 4
      %v3064 = vrot.slane %v2394, 4
      %v3065 = vsel %vm971, %v3063, %v3064
      %v3066 = vrot.slane %v2395, 4
      %v3067 = vsel %vm971, %v3064, %v3066
      %v3068 = vrot.slane %v2396, 4
      %v3069 = vrot.slane %v2397, 4
      %v3070 = vsel %vm971, %v3068, %v3069
      %v3071 = vrot.slane %v2398, 4
      %v3072 = vsel %vm971, %v3069, %v3071
      %v3073 = vrot.slane %v2399, 4
      %v3074 = vrot.slane %v2400, 4
      %v3075 = vsel %vm971, %v3073, %v3074
      %v3076 = vrot.slane %v2401, 4
      %v3077 = vsel %vm971, %v3074, %v3076
      %v3078 = vrot.slane %v2402, 4
      %v3079 = vrot.slane %v2403, 4
      %v3080 = vsel %vm971, %v3078, %v3079
      %v3081 = vrot.slane %v2404, 4
      %v3082 = vsel %vm971, %v3079, %v3081
      %v3083 = vrot.slane %v2405, 4
      %v3084 = vrot.slane %v2406, 4
      %v3085 = vsel %vm971, %v3083, %v3084
      %v3086 = vrot.slane %v2407, 4
      %v3087 = vsel %vm971, %v3084, %v3086
      %v3088 = vrot.slane %v2408, 4
      %v3089 = vrot.slane %v2409, 4
      %v3090 = vsel %vm971, %v3088, %v3089
      %v3091 = vrot.slane %v2410, 4
      %v3092 = vsel %vm971, %v3089, %v3091
      %v3093 = vrot.slane %v2411, 4
      %v3094 = vrot.slane %v2412, 4
      %v3095 = vsel %vm971, %v3093, %v3094
      %v3096 = vrot.slane %v2413, 4
      %v3097 = vsel %vm971, %v3094, %v3096
      %v3098 = vrot.slane %v2414, 4
      %v3099 = vrot.slane %v2415, 4
      %v3100 = vsel %vm971, %v3098, %v3099
      %v3101 = vrot.slane %v2416, 4
      %v3102 = vsel %vm971, %v3099, %v3101
      %v3103 = vrot.slane %v2417, 4
      %v3104 = vrot.slane %v2418, 4
      %v3105 = vsel %vm971, %v3103, %v3104
      %v3106 = vrot.slane %v2419, 4
      %v3107 = vsel %vm971, %v3104, %v3106
      %v3108 = vrot.slane %v2420, 4
      %v3109 = vrot.slane %v2421, 4
      %v3110 = vsel %vm971, %v3108, %v3109
      %v3111 = vrot.slane %v2422, 4
      %v3112 = vsel %vm971, %v3109, %v3111
      %v3113 = vrot.slane %v2423, 4
      %v3114 = vrot.slane %v2424, 4
      %v3115 = vsel %vm971, %v3113, %v3114
      %v3116 = vrot.slane %v2425, 4
      %v3117 = vsel %vm971, %v3114, %v3116
      %v3118 = vrot.slane %v2426, 4
      %v3119 = vrot.slane %v2427, 4
      %v3120 = vsel %vm971, %v3118, %v3119
      %v3121 = vrot.slane %v2428, 4
      %v3122 = vsel %vm971, %v3119, %v3121
      %v3123 = vrot.slane %v2429, 4
      %v3124 = vrot.slane %v2430, 4
      %v3125 = vsel %vm971, %v3123, %v3124
      %v3126 = vrot.slane %v2431, 4
      %v3127 = vsel %vm971, %v3124, %v3126
      %v3128 = vrot.slane %v2432, 4
      %v3129 = vrot.slane %v2433, 4
      %v3130 = vsel %vm971, %v3128, %v3129
      %v3131 = vrot.slane %v2434, 4
      %v3132 = vsel %vm971, %v3129, %v3131
      %v3133 = vrot.slane %v2435, 4
      %v3134 = vrot.slane %v2436, 4
      %v3135 = vsel %vm971, %v3133, %v3134
      %v3136 = vrot.slane %v2437, 4
      %v3137 = vsel %vm971, %v3134, %v3136
      %v3178 = vmax.f32 %v2998, %v3040
      %v3179 = vmax.f32 %v2999, %v3042
      %v3180 = vmax.f32 %v3000, %v3045
      %v3181 = vmax.f32 %v3001, %v3047
      %v3182 = vmax.f32 %v3002, %v3050
      %v3183 = vmax.f32 %v3003, %v3052
      %v3184 = vmax.f32 %v3004, %v3055
      %v3185 = vmax.f32 %v3005, %v3057
      %v3186 = vmax.f32 %v3006, %v3060
      %v3187 = vmax.f32 %v3007, %v3062
      %v3188 = vmax.f32 %v3008, %v3065
      %v3189 = vmax.f32 %v3009, %v3067
      %v3190 = vmax.f32 %v3010, %v3070
      %v3191 = vmax.f32 %v3011, %v3072
      %v3192 = vmax.f32 %v3012, %v3075
      %v3193 = vmax.f32 %v3013, %v3077
      %v3194 = vmax.f32 %v3014, %v3080
      %v3195 = vmax.f32 %v3015, %v3082
      %v3196 = vmax.f32 %v3016, %v3085
      %v3197 = vmax.f32 %v3017, %v3087
      %v3198 = vmax.f32 %v3018, %v3090
      %v3199 = vmax.f32 %v3019, %v3092
      %v3200 = vmax.f32 %v3020, %v3095
      %v3201 = vmax.f32 %v3021, %v3097
      %v3202 = vmax.f32 %v3022, %v3100
      %v3203 = vmax.f32 %v3023, %v3102
      %v3204 = vmax.f32 %v3024, %v3105
      %v3205 = vmax.f32 %v3025, %v3107
      %v3206 = vmax.f32 %v3026, %v3110
      %v3207 = vmax.f32 %v3027, %v3112
      %v3208 = vmax.f32 %v3028, %v3115
      %v3209 = vmax.f32 %v3029, %v3117
      %v3210 = vmax.f32 %v3030, %v3120
      %v3211 = vmax.f32 %v3031, %v3122
      %v3212 = vmax.f32 %v3032, %v3125
      %v3213 = vmax.f32 %v3033, %v3127
      %v3214 = vmax.f32 %v3034, %v3130
      %v3215 = vmax.f32 %v3035, %v3132
      %v3216 = vmax.f32 %v3036, %v3135
      %v3217 = vmax.f32 %v3037, %v3137
      %v3218 = vmax.f32 %v3178, %v3180
      %v3219 = vmax.f32 %v3179, %v3181
      %v3220 = vmax.f32 %v3180, %v3182
      %v3221 = vmax.f32 %v3181, %v3183
      %v3222 = vmax.f32 %v3182, %v3184
      %v3223 = vmax.f32 %v3183, %v3185
      %v3224 = vmax.f32 %v3184, %v3186
      %v3225 = vmax.f32 %v3185, %v3187
      %v3226 = vmax.f32 %v3186, %v3188
      %v3227 = vmax.f32 %v3187, %v3189
      %v3228 = vmax.f32 %v3188, %v3190
      %v3229 = vmax.f32 %v3189, %v3191
      %v3230 = vmax.f32 %v3190, %v3192
      %v3231 = vmax.f32 %v3191, %v3193
      %v3232 = vmax.f32 %v3192, %v3194
      %v3233 = vmax.f32 %v3193, %v3195
      %v3234 = vmax.f32 %v3194, %v3196
      %v3235 = vmax.f32 %v3195, %v3197
      %v3236 = vmax.f32 %v3196, %v3198
      %v3237 = vmax.f32 %v3197, %v3199
      %v3238 = vmax.f32 %v3198, %v3200
      %v3239 = vmax.f32 %v3199, %v3201
      %v3240 = vmax.f32 %v3200, %v3202
      %v3241 = vmax.f32 %v3201, %v3203
      %v3242 = vmax.f32 %v3202, %v3204
      %v3243 = vmax.f32 %v3203, %v3205
      %v3244 = vmax.f32 %v3204, %v3206
      %v3245 = vmax.f32 %v3205, %v3207
      %v3246 = vmax.f32 %v3206, %v3208
      %v3247 = vmax.f32 %v3207, %v3209
      %v3248 = vmax.f32 %v3208, %v3210
      %v3249 = vmax.f32 %v3209, %v3211
      %v3250 = vmax.f32 %v3218, %v3182
      %v3251 = vmax.f32 %v3219, %v3183
      %v3252 = vmax.f32 %v3220, %v3184
      %v3253 = vmax.f32 %v3221, %v3185
      %v3254 = vmax.f32 %v3222, %v3186
      %v3255 = vmax.f32 %v3223, %v3187
      %v3256 = vmax.f32 %v3224, %v3188
      %v3257 = vmax.f32 %v3225, %v3189
      %v3258 = vmax.f32 %v3226, %v3190
      %v3259 = vmax.f32 %v3227, %v3191
      %v3260 = vmax.f32 %v3228, %v3192
      %v3261 = vmax.f32 %v3229, %v3193
      %v3262 = vmax.f32 %v3230, %v3194
      %v3263 = vmax.f32 %v3231, %v3195
      %v3264 = vmax.f32 %v3232, %v3196
      %v3265 = vmax.f32 %v3233, %v3197
      %v3266 = vmax.f32 %v3234, %v3198
      %v3267 = vmax.f32 %v3235, %v3199
      %v3268 = vmax.f32 %v3236, %v3200
      %v3269 = vmax.f32 %v3237, %v3201
      %v3270 = vmax.f32 %v3238, %v3202
      %v3271 = vmax.f32 %v3239, %v3203
      %v3272 = vmax.f32 %v3240, %v3204
      %v3273 = vmax.f32 %v3241, %v3205
      %v3274 = vmax.f32 %v3242, %v3206
      %v3275 = vmax.f32 %v3243, %v3207
      %v3276 = vmax.f32 %v3244, %v3208
      %v3277 = vmax.f32 %v3245, %v3209
      %v3278 = vmax.f32 %v3246, %v3210
      %v3279 = vmax.f32 %v3247, %v3211
      %v3280 = vmax.f32 %v3248, %v3212
      %v3281 = vmax.f32 %v3249, %v3213
      %v3282 = vmax.f32 %v3250, %v3184
      %v3283 = vmax.f32 %v3251, %v3185
      %v3284 = vmax.f32 %v3252, %v3186
      %v3285 = vmax.f32 %v3253, %v3187
      %v3286 = vmax.f32 %v3254, %v3188
      %v3287 = vmax.f32 %v3255, %v3189
      %v3288 = vmax.f32 %v3256, %v3190
      %v3289 = vmax.f32 %v3257, %v3191
      %v3290 = vmax.f32 %v3258, %v3192
      %v3291 = vmax.f32 %v3259, %v3193
      %v3292 = vmax.f32 %v3260, %v3194
      %v3293 = vmax.f32 %v3261, %v3195
      %v3294 = vmax.f32 %v3262, %v3196
      %v3295 = vmax.f32 %v3263, %v3197
      %v3296 = vmax.f32 %v3264, %v3198
      %v3297 = vmax.f32 %v3265, %v3199
      %v3298 = vmax.f32 %v3266, %v3200
      %v3299 = vmax.f32 %v3267, %v3201
      %v3300 = vmax.f32 %v3268, %v3202
      %v3301 = vmax.f32 %v3269, %v3203
      %v3302 = vmax.f32 %v3270, %v3204
      %v3303 = vmax.f32 %v3271, %v3205
      %v3304 = vmax.f32 %v3272, %v3206
      %v3305 = vmax.f32 %v3273, %v3207
      %v3306 = vmax.f32 %v3274, %v3208
      %v3307 = vmax.f32 %v3275, %v3209
      %v3308 = vmax.f32 %v3276, %v3210
      %v3309 = vmax.f32 %v3277, %v3211
      %v3310 = vmax.f32 %v3278, %v3212
      %v3311 = vmax.f32 %v3279, %v3213
      %v3312 = vmax.f32 %v3280, %v3214
      %v3313 = vmax.f32 %v3281, %v3215
      %v3314 = vmax.f32 %v3282, %v3186
      %v3315 = vmax.f32 %v3283, %v3187
      %v3316 = vmax.f32 %v3284, %v3188
      %v3317 = vmax.f32 %v3285, %v3189
      %v3318 = vmax.f32 %v3286, %v3190
      %v3319 = vmax.f32 %v3287, %v3191
      %v3320 = vmax.f32 %v3288, %v3192
      %v3321 = vmax.f32 %v3289, %v3193
      %v3322 = vmax.f32 %v3290, %v3194
      %v3323 = vmax.f32 %v3291, %v3195
      %v3324 = vmax.f32 %v3292, %v3196
      %v3325 = vmax.f32 %v3293, %v3197
      %v3326 = vmax.f32 %v3294, %v3198
      %v3327 = vmax.f32 %v3295, %v3199
      %v3328 = vmax.f32 %v3296, %v3200
      %v3329 = vmax.f32 %v3297, %v3201
      %v3330 = vmax.f32 %v3298, %v3202
      %v3331 = vmax.f32 %v3299, %v3203
      %v3332 = vmax.f32 %v3300, %v3204
      %v3333 = vmax.f32 %v3301, %v3205
      %v3334 = vmax.f32 %v3302, %v3206
      %v3335 = vmax.f32 %v3303, %v3207
      %v3336 = vmax.f32 %v3304, %v3208
      %v3337 = vmax.f32 %v3305, %v3209
      %v3338 = vmax.f32 %v3306, %v3210
      %v3339 = vmax.f32 %v3307, %v3211
      %v3340 = vmax.f32 %v3308, %v3212
      %v3341 = vmax.f32 %v3309, %v3213
      %v3342 = vmax.f32 %v3310, %v3214
      %v3343 = vmax.f32 %v3311, %v3215
      %v3344 = vmax.f32 %v3312, %v3216
      %v3345 = vmax.f32 %v3313, %v3217
      %3346 = vst.msk [vmem:[%s147] sm:$0xff] %vm181, %v3314
      %3347 = vst.msk [vmem:[%s147 + $0x8] sm:$0xff] %vm181, %v3315
      %3348 = vst.msk [vmem:[%s147 + $0x10] sm:$0xff] %vm181, %v3316
      %3349 = vst.msk [vmem:[%s147 + $0x18] sm:$0xff] %vm181, %v3317
      %3350 = vst.msk [vmem:[%s147 + $0x20] sm:$0xff] %vm181, %v3318
      %3351 = vst.msk [vmem:[%s147 + $0x28] sm:$0xff] %vm181, %v3319
      %3352 = vst.msk [vmem:[%s147 + $0x30] sm:$0xff] %vm181, %v3320
      %3353 = vst.msk [vmem:[%s147 + $0x38] sm:$0xff] %vm181, %v3321
      %3354 = vst.msk [vmem:[%s147 + $0x40] sm:$0xff] %vm181, %v3322
      %3355 = vst.msk [vmem:[%s147 + $0x48] sm:$0xff] %vm181, %v3323
      %3356 = vst.msk [vmem:[%s147 + $0x50] sm:$0xff] %vm181, %v3324
      %3357 = vst.msk [vmem:[%s147 + $0x58] sm:$0xff] %vm181, %v3325
      %3358 = vst.msk [vmem:[%s147 + $0x60] sm:$0xff] %vm181, %v3326
      %3359 = vst.msk [vmem:[%s147 + $0x68] sm:$0xff] %vm181, %v3327
      %3360 = vst.msk [vmem:[%s147 + $0x70] sm:$0xff] %vm181, %v3328
      %3361 = vst.msk [vmem:[%s147 + $0x78] sm:$0xff] %vm181, %v3329
      %3362 = vst.msk [vmem:[%s147 + $0x80] sm:$0xff] %vm181, %v3330
      %3363 = vst.msk [vmem:[%s147 + $0x88] sm:$0xff] %vm181, %v3331
      %3364 = vst.msk [vmem:[%s147 + $0x90] sm:$0xff] %vm181, %v3332
      %3365 = vst.msk [vmem:[%s147 + $0x98] sm:$0xff] %vm181, %v3333
      %3366 = vst.msk [vmem:[%s147 + $0xa0] sm:$0xff] %vm181, %v3334
      %3367 = vst.msk [vmem:[%s147 + $0xa8] sm:$0xff] %vm181, %v3335
      %3368 = vst.msk [vmem:[%s147 + $0xb0] sm:$0xff] %vm181, %v3336
      %3369 = vst.msk [vmem:[%s147 + $0xb8] sm:$0xff] %vm181, %v3337
      %3370 = vst.msk [vmem:[%s147 + $0xc0] sm:$0xff] %vm181, %v3338
      %3371 = vst.msk [vmem:[%s147 + $0xc8] sm:$0xff] %vm181, %v3339
      %3372 = vst.msk [vmem:[%s147 + $0xd0] sm:$0xff] %vm181, %v3340
      %3373 = vst.msk [vmem:[%s147 + $0xd8] sm:$0xff] %vm181, %v3341
      %3374 = vst.msk [vmem:[%s147 + $0xe0] sm:$0xff] %vm181, %v3342
      %3375 = vst.msk [vmem:[%s147 + $0xe8] sm:$0xff] %vm181, %v3343
      %3376 = vst.msk [vmem:[%s147 + $0xf0] sm:$0xff] %vm181, %v3344
      %3377 = vst.msk [vmem:[%s147 + $0xf8] sm:$0xff] %vm181, %v3345
      %p3378 = scmp.lt.s32.totalorder %s16, 1
      %s3379 = scalar_select %p3378, %s16, 1
      %p3380 = scmp.lt.s32.totalorder %s17, 0
      %s3381 = scalar_select %p3380, %s17, 0
      %s3382 = smul.addr %s3379, 128
      %s3383 = sadd.s32 %s3381, %s3382
      %s3384 = smul.addr %s3383, 8
      %s3385 = scalar_lea.vmem %s1, %s3384
      // Predicated region
      $region25: #{spatial_pyramid_pooling.1} parent=23 // pred_check
        %p3386 = pneg %p72
      $region26: #{spatial_pyramid_pooling.1} parent=23 // pred_check_branch
        %3388 = sbr.rel (%p3386) target = $region28
      $region27: #{spatial_pyramid_pooling.1} parent=23 // pred_region
        _
      $region28: #{spatial_pyramid_pooling.1} parent=23 // pred_fallthru
        _
    $region24: #{spatial_pyramid_pooling.1} parent=5 // pred_fallthru
      _
    %p3389 = scmp.le.s32.totalorder 2, %s7
    // Predicated region
    $region29: #{spatial_pyramid_pooling.1} parent=5 // pred_check
      %p3390 = pneg %p3389
    $region30: #{spatial_pyramid_pooling.1} parent=5 // pred_check_branch
      %3392 = sbr.rel (%p3390) target = $region32
    $region31: #{spatial_pyramid_pooling.1} parent=5 // pred_region
      %s3393 = ssub.s32 %s7, 2
      // Predicated region
      $region33: #{spatial_pyramid_pooling.1} parent=31 // pred_check
        %p3394 = pneg %p78
      $region34: #{spatial_pyramid_pooling.1} parent=31 // pred_check_branch
        %3396 = sbr.rel (%p3394) target = $region36
      $region35: #{spatial_pyramid_pooling.1} parent=31 // pred_region
        %p3397 = scmp.lt.s32.totalorder %s18, 1
        %s3398 = scalar_select %p3397, %s18, 1
        %p3399 = scmp.lt.s32.totalorder %s19, 0
        %s3400 = scalar_select %p3399, %s19, 0
        %s3401 = smul.addr %s3398, 128
        %s3402 = sadd.s32 %s3400, %s3401
        %s3403 = smul.addr %s3402, 8
        %s3404 = scalar_lea.vmem %s1, %s3403
      $region36: #{spatial_pyramid_pooling.1} parent=31 // pred_fallthru
        _
    $region32: #{spatial_pyramid_pooling.1} parent=5 // pred_fallthru
      _
  $region6: #{spatial_pyramid_pooling.1} parent=0 // loop_footer
    %s11 = sadd.s32 1, %s7
  $region7: #{spatial_pyramid_pooling.1} parent=0 // loop_footer_branch
    %6 = sbr.rel target = $region3
  $region8: #{spatial_pyramid_pooling.1} parent=0 // loop_exit
    _

</llo_original>
